<compile_context>
chip_gen: v7x
topology: tpu7x:2x2x1
jax: 0.10.0
libtpu: 0.0.40
codegen_flags: <defaults>
</compile_context>

<pallas_src>
import functools

import jax
import jax.numpy as jnp
from jax import lax
from jax.experimental import pallas as pl
from jax.experimental.pallas import tpu as pltpu

LN_EPS = 1e-5  # PyTorch nn.LayerNorm default
VMEM_LIMIT = 32 * 1024 * 1024


def _round_up(x, m):
    return (x + m - 1) // m * m


def _layer_norm(x, gamma, beta):
    mean = jnp.mean(x, axis=-1, keepdims=True)
    var = jnp.mean((x - mean) ** 2, axis=-1, keepdims=True)
    return (x - mean) * lax.rsqrt(var + LN_EPS) * gamma + beta


# --------------------------- kernel 1: fused MLPs --------------------------- #

def _edge_model_kernel(x3_ref, eb_ref, uvw_ref, rhs3_ref, pvec_ref,
                       w2_ref, w3_ref, b3_ref, eo_ref, uw_ref, *, H, BP):
    f32 = jnp.float32
    bf16 = jnp.bfloat16

    x3 = x3_ref[...]                               # (TE, 3D) bf16
    eb = eb_ref[...]                               # (TE, 1) int32
    TE = x3.shape[0]

    # edge -> graph one-hot selector (never hits HBM); bf16 so the gather
    # matmul below is a single bf16 MXU pass.
    sel = eb == lax.broadcasted_iota(jnp.int32, (TE, BP), 1)
    sel_bf = sel.astype(bf16)

    # Fused first layers of edge_mlp (columns [0:H]) and weight_mlp ([H:2H]):
    #   cat([src,dest,ea]) @ [[W1_s|0],[W1_d|0],[W1_e|V1_e]]
    # + one-hot gather of (u @ [W1_u|V1_u])
    # + [b1 | c1]
    hg = jnp.dot(x3, rhs3_ref[...], preferred_element_type=f32)          # (TE,2H)
    hg = hg + jnp.dot(sel_bf, uvw_ref[...], preferred_element_type=f32)  # u gather
    hg = hg + pvec_ref[0:1, :]

    h = hg[:, 0:H]          # edge_mlp pre-activation   (128-aligned lane slice)
    g = hg[:, H:2 * H]      # weight_mlp pre-activation

    # ---- weight_mlp tail: LN -> ReLU -> Linear(H, 1) (VPU + lane reduce) ----
    g = _layer_norm(g, pvec_ref[1:2, H:2 * H], pvec_ref[2:3, H:2 * H])
    g = jnp.maximum(g, 0.0)
    wts = (jnp.sum(g * pvec_ref[3:4, H:2 * H], axis=-1, keepdims=True)
           + pvec_ref[5:6, 0:1])                                         # + c2
    uw_ref[...] = wts

    # ---- edge_mlp tail: LN -> ReLU -> Linear -> LN -> ReLU -> Linear --------
    h = _layer_norm(h, pvec_ref[1:2, 0:H], pvec_ref[2:3, 0:H])
    h = jnp.maximum(h, 0.0).astype(bf16)
    h = jnp.dot(h, w2_ref[...], preferred_element_type=f32) + pvec_ref[3:4, 0:H]
    h = _layer_norm(h, pvec_ref[4:5, 0:H], pvec_ref[4:5, H:2 * H])
    h = jnp.maximum(h, 0.0).astype(bf16)
    eo_ref[...] = (jnp.dot(h, w3_ref[...], preferred_element_type=f32)
                   + b3_ref[...])


# --------------- kernel 2: per-graph online max / sum-of-exp ---------------- #

def _seg_stats_kernel(eb_ref, wts_ref, stats_ref, *, BP):
    @pl.when(pl.program_id(0) == 0)
    def _():
        stats_ref[0:1, :] = jnp.full((1, BP), -1e30, jnp.float32)
        stats_ref[1:2, :] = jnp.zeros((1, BP), jnp.float32)

    eb = eb_ref[...]                               # (TE, 1) int32
    wts = wts_ref[...]                             # (TE, 1) f32
    TE = wts.shape[0]
    sel = eb == lax.broadcasted_iota(jnp.int32, (TE, BP), 1)

    m_old = stats_ref[0:1, :]
    l_old = stats_ref[1:2, :]
    t_max = jnp.max(jnp.where(sel, wts, -1e30), axis=0, keepdims=True)   # (1,BP)
    m_new = jnp.maximum(m_old, t_max)
    p = jnp.where(sel, jnp.exp(wts - m_new), 0.0)                        # (TE,BP)
    l_new = l_old * jnp.exp(m_old - m_new) + jnp.sum(p, axis=0, keepdims=True)
    stats_ref[0:1, :] = m_new
    stats_ref[1:2, :] = l_new


# ------------------- kernel 3: normalize (scatter softmax) ------------------ #

def _seg_norm_kernel(eb_ref, wts_ref, stats_ref, nw_ref, *, BP):
    eb = eb_ref[...]
    wts = wts_ref[...]
    TE = wts.shape[0]
    sel = eb == lax.broadcasted_iota(jnp.int32, (TE, BP), 1)
    sel_f = sel.astype(jnp.float32)

    m = stats_ref[0:1, :]                                                # (1,BP)
    l = stats_ref[1:2, :]
    inv = jnp.where(l > 0.0, 1.0 / l, 0.0)     # B divides per tile, not E
    edge_m = jnp.sum(sel_f * m, axis=1, keepdims=True)                   # (TE,1)
    edge_inv = jnp.sum(sel_f * inv, axis=1, keepdims=True)               # (TE,1)
    # Guard: edges whose graph id is out of range (or padding) get weight 0
    # instead of inf/NaN.
    nw_ref[...] = jnp.where(edge_inv > 0.0,
                            jnp.exp(wts - edge_m) * edge_inv, 0.0)


# ------------------------------ wrapper ------------------------------------ #

@functools.partial(jax.jit, static_argnames=("edge_tile",))
def edge_model_forward(src, dest, edge_attr, u, edge_batch, params,
                       edge_tile=512):
    rhs3, uproj, pvec, w2, w3, b3 = params
    E, D = edge_attr.shape
    B, U = u.shape
    H = w2.shape[0]
    OUT = w3.shape[1]

    assert edge_tile % 16 == 0
    te = min(edge_tile, _round_up(E, 16))
    EP = _round_up(E, te)
    nt = EP // te
    BP = _round_up(B, 16)

    # Hoisted per-call u projection (tiny matmul, done once, not per tile).
    uVW = jnp.dot(u.astype(jnp.bfloat16), uproj,
                  preferred_element_type=jnp.float32).astype(jnp.bfloat16)
    uVW = jnp.pad(uVW, ((0, BP - B), (0, 0)))                  # (BP, 2H)

    # bf16 lane-concat of edge features at the boundary: one K=3D matmul
    # operand, half the HBM bytes of f32 inputs.
    x3 = jnp.concatenate([src, dest, edge_attr], axis=1).astype(jnp.bfloat16)
    x3 = jnp.pad(x3, ((0, EP - E), (0, 0)))                    # (EP, 3D)
    eb = edge_batch.astype(jnp.int32).reshape(E, 1)
    eb = jnp.pad(eb, ((0, EP - E), (0, 0)), constant_values=BP)  # BP = no graph

    cparams_par = pltpu.CompilerParams(dimension_semantics=("parallel",),
                                       vmem_limit_bytes=VMEM_LIMIT)
    cparams_arb = pltpu.CompilerParams(dimension_semantics=("arbitrary",),
                                       vmem_limit_bytes=VMEM_LIMIT)

    eo, uw = pl.pallas_call(
        functools.partial(_edge_model_kernel, H=H, BP=BP),
        out_shape=(jax.ShapeDtypeStruct((EP, OUT), jnp.float32),
                   jax.ShapeDtypeStruct((EP, 1), jnp.float32)),
        grid=(nt,),
        in_specs=[pl.BlockSpec((te, 3 * D), lambda i: (i, 0)),      # x3
                  pl.BlockSpec((te, 1), lambda i: (i, 0)),          # edge_batch
                  pl.BlockSpec((BP, 2 * H), lambda i: (0, 0)),      # uVW
                  pl.BlockSpec((3 * D, 2 * H), lambda i: (0, 0)),   # rhs3
                  pl.BlockSpec((6, 2 * H), lambda i: (0, 0)),       # packed vecs
                  pl.BlockSpec((H, H), lambda i: (0, 0)),           # w2
                  pl.BlockSpec((H, OUT), lambda i: (0, 0)),         # w3
                  pl.BlockSpec((1, OUT), lambda i: (0, 0))],        # b3
        out_specs=(pl.BlockSpec((te, OUT), lambda i: (i, 0)),
                   pl.BlockSpec((te, 1), lambda i: (i, 0))),
        compiler_params=cparams_par,
    )(x3, eb, uVW, rhs3, pvec, w2, w3, b3)

    stats = pl.pallas_call(
        functools.partial(_seg_stats_kernel, BP=BP),
        out_shape=jax.ShapeDtypeStruct((2, BP), jnp.float32),
        grid=(nt,),
        in_specs=[pl.BlockSpec((te, 1), lambda i: (i, 0)),
                  pl.BlockSpec((te, 1), lambda i: (i, 0))],
        out_specs=pl.BlockSpec((2, BP), lambda i: (0, 0)),
        compiler_params=cparams_arb,
    )(eb, uw)

    nw = pl.pallas_call(
        functools.partial(_seg_norm_kernel, BP=BP),
        out_shape=jax.ShapeDtypeStruct((EP, 1), jnp.float32),
        grid=(nt,),
        in_specs=[pl.BlockSpec((te, 1), lambda i: (i, 0)),
                  pl.BlockSpec((te, 1), lambda i: (i, 0)),
                  pl.BlockSpec((2, BP), lambda i: (0, 0))],
        out_specs=pl.BlockSpec((te, 1), lambda i: (i, 0)),
        compiler_params=cparams_par,
    )(eb, uw, stats)

    return eo[:E], uw[:E], nw[:E]


# ------------------------------ parameters --------------------------------- #

def _uniform(key, shape, lim):
    return jax.random.uniform(key, shape, jnp.float32, -lim, lim)


class EdgeModelPallas:
    """JAX/Pallas port of EdgeModel (inference semantics, 'use_vec' branch)."""

    def __init__(self, edge_in_dim, hidden_dim, edge_out_dim,
                 edge_weight_dropout, u_dim, ablation, key):
        del edge_out_dim, edge_weight_dropout  # unused at inference
        self.ablation = ablation
        assert 'no_vec' not in ablation, "only the 'use_vec' branch is implemented"
        D, U, H = edge_in_dim, u_dim, hidden_dim
        OUT = 768 // 2
        assert H % 128 == 0     # lane-aligned split of the fused (., 2H) matmul

        ks = jax.random.split(key, 10)
        # edge_mlp: Linear(3D+U,H) -> LN -> ReLU -> Linear(H,H) -> LN -> ReLU -> Linear(H,384)
        lim1 = 1.0 / float(3 * D + U) ** 0.5
        w1 = _uniform(ks[0], (3 * D + U, H), lim1)
        b1 = _uniform(ks[1], (H,), lim1)
        limh = 1.0 / float(H) ** 0.5
        w2 = _uniform(ks[2], (H, H), limh)
        b2 = _uniform(ks[3], (H,), limh)
        w3 = _uniform(ks[4], (H, OUT), limh)
        b3 = _uniform(ks[5], (OUT,), limh)
        # weight_mlp: Linear(D+U, H) -> LN -> ReLU -> Linear(H, 1)
        limv = 1.0 / float(D + U) ** 0.5
        v1 = _uniform(ks[6], (D + U, H), limv)
        c1 = _uniform(ks[7], (H,), limv)
        v2 = _uniform(ks[8], (H,), limh)
        c2 = _uniform(ks[9], (), limh)

        W1_s, W1_d, W1_e, W1_u = w1[0:D], w1[D:2 * D], w1[2 * D:3 * D], w1[3 * D:]
        V1_e, V1_u = v1[0:D], v1[D:]
        zDH = jnp.zeros((D, H), jnp.float32)
        # Fused first-layer RHS: columns [0:H] feed edge_mlp, [H:2H] feed weight_mlp.
        rhs3 = jnp.concatenate([
            jnp.concatenate([W1_s, zDH], axis=1),
            jnp.concatenate([W1_d, zDH], axis=1),
            jnp.concatenate([W1_e, V1_e], axis=1)], axis=0).astype(jnp.bfloat16)
        uproj = jnp.concatenate([W1_u, V1_u], axis=1).astype(jnp.bfloat16)  # (U,2H)

        ones = jnp.ones((H,), jnp.float32)
        zeros = jnp.zeros((H,), jnp.float32)
        pvec = jnp.stack([
            jnp.concatenate([b1, c1]),          # biases of the fused first layer
            jnp.concatenate([ones, ones]),      # LN gamma (edge | weight)
            jnp.concatenate([zeros, zeros]),    # LN beta  (edge | weight)
            jnp.concatenate([b2, v2]),          # edge layer-2 bias | weight head row
            jnp.concatenate([ones, zeros]),     # edge layer-2 LN gamma | beta
            jnp.full((2 * H,), c2),             # weight head bias (broadcast row)
        ], axis=0)                              # (6, 2H) f32

        self.params = (rhs3,                       # (3D, 2H) bf16
                       uproj,                      # (U, 2H) bf16
                       pvec,                       # (6, 2H) f32
                       w2.astype(jnp.bfloat16),    # (H, H)
                       w3.astype(jnp.bfloat16),    # (H, OUT)
                       b3.reshape(1, OUT))         # (1, OUT) f32

    def __call__(self, src, dest, edge_attr, u, edge_batch):
        return edge_model_forward(src, dest, edge_attr, u, edge_batch, self.params)


# --------------------------------- main ------------------------------------ #

if __name__ == "__main__":
    key = jax.random.PRNGKey(0)
    k_model, k_src, k_dst, k_ea, k_u = jax.random.split(key, 5)

    E = 16             # number of edges
    B = 2              # number of graphs
    edge_in_dim = 32
    u_dim = 16
    hidden_dim = 128

    ablation = ['edge_weight', 'use_vec']
    model = EdgeModelPallas(edge_in_dim, hidden_dim, 768 // 2, 0.1,
                            u_dim, ablation, k_model)

    src = jax.random.normal(k_src, (E, edge_in_dim), jnp.float32)
    dest = jax.random.normal(k_dst, (E, edge_in_dim), jnp.float32)
    edge_attr = jax.random.normal(k_ea, (E, edge_in_dim), jnp.float32)
    u = jax.random.normal(k_u, (B, u_dim), jnp.float32)
    edge_batch = jnp.array([0] * (E // 2) + [1] * (E // 2), dtype=jnp.int32)

    edge_out, unnorm_wts, norm_wts = model(src, dest, edge_attr, u, edge_batch)
    jax.block_until_ready((edge_out, unnorm_wts, norm_wts))

    assert edge_out.shape == (E, 384)
    assert unnorm_wts.shape == (E, 1)
    assert norm_wts.shape == (E, 1)
    # per-graph softmax weights sum to 1
    assert abs(float(jnp.sum(norm_wts)) - B) < 1e-3

    print("KERNEL_OK")
</pallas_src>

<mosaic_0001>
module attributes {stable_mosaic.version = 11 : i64} {
  func.func @_seg_norm_kernel(%arg0: i32, %arg1: memref<16x1xi32, #tpu.memory_space<vmem>>, %arg2: memref<16x1xf32, #tpu.memory_space<vmem>>, %arg3: memref<2x16xf32, #tpu.memory_space<vmem>>, %arg4: memref<16x1xf32, #tpu.memory_space<vmem>>) attributes {dimension_semantics = [#tpu.dimension_semantics<parallel>], iteration_bounds = array<i64: 1>, scalar_prefetch = 0 : i64, scratch_operands = 0 : i64, tpu.core_type = #tpu.core_type<tc>, window_params = [{transform_indices = @transform_0, window_bounds = array<i64: 16, 1>}, {transform_indices = @transform_1, window_bounds = array<i64: 16, 1>}, {pipeline_mode = #tpu.pipeline_mode<synchronous>, transform_indices = @transform_2, window_bounds = array<i64: 2, 16>}, {transform_indices = @transform_3, window_bounds = array<i64: 16, 1>}]} {
    %c0 = arith.constant 0 : index
    %c0_0 = arith.constant 0 : index
    %0 = vector.load %arg1[%c0, %c0_0] : memref<16x1xi32, #tpu.memory_space<vmem>>, vector<16x1xi32>
    %c0_1 = arith.constant 0 : index
    %c0_2 = arith.constant 0 : index
    %1 = vector.load %arg2[%c0_1, %c0_2] : memref<16x1xf32, #tpu.memory_space<vmem>>, vector<16x1xf32>
    %2 = tpu.iota {dimensions = array<i32: 1>} : vector<16x16xi32>
    %3 = vector.broadcast %0 : vector<16x1xi32> to vector<16x16xi32>
    %4 = arith.cmpi eq, %3, %2 : vector<16x16xi32>
    %5 = arith.extui %4 : vector<16x16xi1> to vector<16x16xi32>
    %6 = arith.sitofp %5 : vector<16x16xi32> to vector<16x16xf32>
    %c0_3 = arith.constant 0 : index
    %c0_4 = arith.constant 0 : index
    %7 = vector.load %arg3[%c0_3, %c0_4] : memref<2x16xf32, #tpu.memory_space<vmem>>, vector<1x16xf32>
    %c1 = arith.constant 1 : index
    %c0_5 = arith.constant 0 : index
    %8 = vector.load %arg3[%c1, %c0_5] : memref<2x16xf32, #tpu.memory_space<vmem>>, vector<1x16xf32>
    %cst = arith.constant 0.000000e+00 : f32
    %9 = vector.broadcast %cst : f32 to vector<1x16xf32>
    %10 = arith.cmpf ogt, %8, %9 : vector<1x16xf32>
    %cst_6 = arith.constant 1.000000e+00 : f32
    %11 = vector.broadcast %cst_6 : f32 to vector<1x16xf32>
    %12 = arith.divf %11, %8 : vector<1x16xf32>
    %cst_7 = arith.constant 0.000000e+00 : f32
    %13 = vector.broadcast %cst_7 : f32 to vector<1x16xf32>
    %14 = arith.select %10, %12, %13 : vector<1x16xi1>, vector<1x16xf32>
    %15 = vector.broadcast %7 : vector<1x16xf32> to vector<16x16xf32>
    %16 = arith.mulf %6, %15 : vector<16x16xf32>
    %cst_8 = arith.constant dense<0.000000e+00> : vector<16xf32>
    %17 = vector.multi_reduction <add>, %16, %cst_8 [1] : vector<16x16xf32> to vector<16xf32>
    %18 = vector.shape_cast %17 : vector<16xf32> to vector<16x1xf32>
    %19 = vector.broadcast %14 : vector<1x16xf32> to vector<16x16xf32>
    %20 = arith.mulf %6, %19 : vector<16x16xf32>
    %cst_9 = arith.constant dense<0.000000e+00> : vector<16xf32>
    %21 = vector.multi_reduction <add>, %20, %cst_9 [1] : vector<16x16xf32> to vector<16xf32>
    %22 = vector.shape_cast %21 : vector<16xf32> to vector<16x1xf32>
    %cst_10 = arith.constant 0.000000e+00 : f32
    %23 = vector.broadcast %cst_10 : f32 to vector<16x1xf32>
    %24 = arith.cmpf ogt, %22, %23 : vector<16x1xf32>
    %25 = arith.subf %1, %18 : vector<16x1xf32>
    %26 = math.exp %25 : vector<16x1xf32>
    %27 = arith.mulf %26, %22 : vector<16x1xf32>
    %cst_11 = arith.constant 0.000000e+00 : f32
    %28 = vector.broadcast %cst_11 : f32 to vector<16x1xf32>
    %29 = arith.select %24, %27, %28 : vector<16x1xi1>, vector<16x1xf32>
    %c0_12 = arith.constant 0 : index
    %c0_13 = arith.constant 0 : index
    %30 = vector.load %arg4[%c0_12, %c0_13] : memref<16x1xf32, #tpu.memory_space<vmem>>, vector<16x1xf32>
    tpu.vector_store %arg4[%c0_12, %c0_13], %29 {strides = array<i32>} : memref<16x1xf32, #tpu.memory_space<vmem>>, vector<16x1xf32>,
    return
  }
  func.func @transform_0(%arg0: i32) -> (i32, i32) {
    %c0_i32 = arith.constant 0 : i32
    %c0_i32_0 = arith.constant 0 : i32
    return %arg0, %c0_i32 : i32, i32
  }
  func.func @transform_1(%arg0: i32) -> (i32, i32) {
    %c0_i32 = arith.constant 0 : i32
    %c0_i32_0 = arith.constant 0 : i32
    return %arg0, %c0_i32 : i32, i32
  }
  func.func @transform_2(%arg0: i32) -> (i32, i32) {
    %c0_i32 = arith.constant 0 : i32
    %c0_i32_0 = arith.constant 0 : i32
    %c0_i32_1 = arith.constant 0 : i32
    return %c0_i32, %c0_i32_0 : i32, i32
  }
  func.func @transform_3(%arg0: i32) -> (i32, i32) {
    %c0_i32 = arith.constant 0 : i32
    %c0_i32_0 = arith.constant 0 : i32
    return %arg0, %c0_i32 : i32, i32
  }
}

module attributes {stable_mosaic.version = 11 : i64} {
  func.func @_seg_stats_kernel(%arg0: i32, %arg1: memref<16x1xi32, #tpu.memory_space<vmem>>, %arg2: memref<16x1xf32, #tpu.memory_space<vmem>>, %arg3: memref<2x16xf32, #tpu.memory_space<vmem>>) attributes {dimension_semantics = [#tpu.dimension_semantics<arbitrary>], iteration_bounds = array<i64: 1>, scalar_prefetch = 0 : i64, scratch_operands = 0 : i64, tpu.core_type = #tpu.core_type<tc>, window_params = [{transform_indices = @transform_0, window_bounds = array<i64: 16, 1>}, {transform_indices = @transform_1, window_bounds = array<i64: 16, 1>}, {pipeline_mode = #tpu.pipeline_mode<synchronous>, transform_indices = @transform_2, window_bounds = array<i64: 2, 16>}]} {
    %c0_i32 = arith.constant 0 : i32
    %0 = arith.cmpi eq, %arg0, %c0_i32 : i32
    %1 = arith.extui %0 : i1 to i32
    %c0_i32_0 = arith.constant 0 : i32
    %2 = arith.cmpi ne, %1, %c0_i32_0 : i32
    scf.if %2 {
      %cst_14 = arith.constant -1.000000e+30 : f32
      %31 = vector.broadcast %cst_14 : f32 to vector<1x16xf32>
      %c0_15 = arith.constant 0 : index
      %c0_16 = arith.constant 0 : index
      %32 = vector.load %arg3[%c0_15, %c0_16] : memref<2x16xf32, #tpu.memory_space<vmem>>, vector<1x16xf32>
      tpu.vector_store %arg3[%c0_15, %c0_16], %31 {strides = array<i32>} : memref<2x16xf32, #tpu.memory_space<vmem>>, vector<1x16xf32>,
      %cst_17 = arith.constant 0.000000e+00 : f32
      %33 = vector.broadcast %cst_17 : f32 to vector<1x16xf32>
      %c1_18 = arith.constant 1 : index
      %c0_19 = arith.constant 0 : index
      %34 = vector.load %arg3[%c1_18, %c0_19] : memref<2x16xf32, #tpu.memory_space<vmem>>, vector<1x16xf32>
      tpu.vector_store %arg3[%c1_18, %c0_19], %33 {strides = array<i32>} : memref<2x16xf32, #tpu.memory_space<vmem>>, vector<1x16xf32>,
    } else {
    }
    %c0 = arith.constant 0 : index
    %c0_1 = arith.constant 0 : index
    %3 = vector.load %arg1[%c0, %c0_1] : memref<16x1xi32, #tpu.memory_space<vmem>>, vector<16x1xi32>
    %c0_2 = arith.constant 0 : index
    %c0_3 = arith.constant 0 : index
    %4 = vector.load %arg2[%c0_2, %c0_3] : memref<16x1xf32, #tpu.memory_space<vmem>>, vector<16x1xf32>
    %5 = tpu.iota {dimensions = array<i32: 1>} : vector<16x16xi32>
    %6 = vector.broadcast %3 : vector<16x1xi32> to vector<16x16xi32>
    %7 = arith.cmpi eq, %6, %5 : vector<16x16xi32>
    %c0_4 = arith.constant 0 : index
    %c0_5 = arith.constant 0 : index
    %8 = vector.load %arg3[%c0_4, %c0_5] : memref<2x16xf32, #tpu.memory_space<vmem>>, vector<1x16xf32>
    %c1 = arith.constant 1 : index
    %c0_6 = arith.constant 0 : index
    %9 = vector.load %arg3[%c1, %c0_6] : memref<2x16xf32, #tpu.memory_space<vmem>>, vector<1x16xf32>
    %cst = arith.constant -1.000000e+30 : f32
    %10 = vector.shape_cast %4 : vector<16x1xf32> to vector<16x1xf32>
    %11 = vector.broadcast %10 : vector<16x1xf32> to vector<16x16xf32>
    %12 = vector.broadcast %cst : f32 to vector<16x16xf32>
    %13 = arith.select %7, %11, %12 : vector<16x16xi1>, vector<16x16xf32>
    %cst_7 = arith.constant dense<0xFF800000> : vector<16xf32>
    %14 = vector.multi_reduction <maximumf>, %13, %cst_7 [0] : vector<16x16xf32> to vector<16xf32>
    %15 = vector.shape_cast %14 : vector<16xf32> to vector<1x16xf32>
    %16 = arith.maximumf %8, %15 : vector<1x16xf32>
    %17 = vector.broadcast %4 : vector<16x1xf32> to vector<16x16xf32>
    %18 = vector.broadcast %16 : vector<1x16xf32> to vector<16x16xf32>
    %19 = arith.subf %17, %18 : vector<16x16xf32>
    %20 = math.exp %19 : vector<16x16xf32>
    %cst_8 = arith.constant 0.000000e+00 : f32
    %21 = vector.broadcast %cst_8 : f32 to vector<16x16xf32>
    %22 = arith.select %7, %20, %21 : vector<16x16xi1>, vector<16x16xf32>
    %23 = arith.subf %8, %16 : vector<1x16xf32>
    %24 = math.exp %23 : vector<1x16xf32>
    %25 = arith.mulf %9, %24 : vector<1x16xf32>
    %cst_9 = arith.constant dense<0.000000e+00> : vector<16xf32>
    %26 = vector.multi_reduction <add>, %22, %cst_9 [0] : vector<16x16xf32> to vector<16xf32>
    %27 = vector.shape_cast %26 : vector<16xf32> to vector<1x16xf32>
    %28 = arith.addf %25, %27 : vector<1x16xf32>
    %c0_10 = arith.constant 0 : index
    %c0_11 = arith.constant 0 : index
    %29 = vector.load %arg3[%c0_10, %c0_11] : memref<2x16xf32, #tpu.memory_space<vmem>>, vector<1x16xf32>
    tpu.vector_store %arg3[%c0_10, %c0_11], %16 {strides = array<i32>} : memref<2x16xf32, #tpu.memory_space<vmem>>, vector<1x16xf32>,
    %c1_12 = arith.constant 1 : index
    %c0_13 = arith.constant 0 : index
    %30 = vector.load %arg3[%c1_12, %c0_13] : memref<2x16xf32, #tpu.memory_space<vmem>>, vector<1x16xf32>
    tpu.vector_store %arg3[%c1_12, %c0_13], %28 {strides = array<i32>} : memref<2x16xf32, #tpu.memory_space<vmem>>, vector<1x16xf32>,
    return
  }
  func.func @transform_0(%arg0: i32) -> (i32, i32) {
    %c0_i32 = arith.constant 0 : i32
    %c0_i32_0 = arith.constant 0 : i32
    return %arg0, %c0_i32 : i32, i32
  }
  func.func @transform_1(%arg0: i32) -> (i32, i32) {
    %c0_i32 = arith.constant 0 : i32
    %c0_i32_0 = arith.constant 0 : i32
    return %arg0, %c0_i32 : i32, i32
  }
  func.func @transform_2(%arg0: i32) -> (i32, i32) {
    %c0_i32 = arith.constant 0 : i32
    %c0_i32_0 = arith.constant 0 : i32
    %c0_i32_1 = arith.constant 0 : i32
    return %c0_i32, %c0_i32_0 : i32, i32
  }
}

module attributes {stable_mosaic.version = 11 : i64} {
  func.func @_edge_model_kernel(%arg0: i32, %arg1: memref<16x96xbf16, #tpu.memory_space<vmem>>, %arg2: memref<16x1xi32, #tpu.memory_space<vmem>>, %arg3: memref<16x256xbf16, #tpu.memory_space<vmem>>, %arg4: memref<96x256xbf16, #tpu.memory_space<vmem>>, %arg5: memref<6x256xf32, #tpu.memory_space<vmem>>, %arg6: memref<128x128xbf16, #tpu.memory_space<vmem>>, %arg7: memref<128x384xbf16, #tpu.memory_space<vmem>>, %arg8: memref<1x384xf32, #tpu.memory_space<vmem>>, %arg9: memref<16x384xf32, #tpu.memory_space<vmem>>, %arg10: memref<16x1xf32, #tpu.memory_space<vmem>>) attributes {dimension_semantics = [#tpu.dimension_semantics<parallel>], iteration_bounds = array<i64: 1>, scalar_prefetch = 0 : i64, scratch_operands = 0 : i64, tpu.core_type = #tpu.core_type<tc>, window_params = [{transform_indices = @transform_0, window_bounds = array<i64: 16, 96>}, {transform_indices = @transform_1, window_bounds = array<i64: 16, 1>}, {pipeline_mode = #tpu.pipeline_mode<synchronous>, transform_indices = @transform_2, window_bounds = array<i64: 16, 256>}, {pipeline_mode = #tpu.pipeline_mode<synchronous>, transform_indices = @transform_3, window_bounds = array<i64: 96, 256>}, {pipeline_mode = #tpu.pipeline_mode<synchronous>, transform_indices = @transform_4, window_bounds = array<i64: 6, 256>}, {pipeline_mode = #tpu.pipeline_mode<synchronous>, transform_indices = @transform_5, window_bounds = array<i64: 128, 128>}, {pipeline_mode = #tpu.pipeline_mode<synchronous>, transform_indices = @transform_6, window_bounds = array<i64: 128, 384>}, {pipeline_mode = #tpu.pipeline_mode<synchronous>, transform_indices = @transform_7, window_bounds = array<i64: 1, 384>}, {transform_indices = @transform_8, window_bounds = array<i64: 16, 384>}, {transform_indices = @transform_9, window_bounds = array<i64: 16, 1>}]} {
    %c0 = arith.constant 0 : index
    %c0_0 = arith.constant 0 : index
    %0 = vector.load %arg1[%c0, %c0_0] : memref<16x96xbf16, #tpu.memory_space<vmem>>, vector<16x96xbf16>
    %c0_1 = arith.constant 0 : index
    %c0_2 = arith.constant 0 : index
    %1 = vector.load %arg2[%c0_1, %c0_2] : memref<16x1xi32, #tpu.memory_space<vmem>>, vector<16x1xi32>
    %2 = tpu.iota {dimensions = array<i32: 1>} : vector<16x16xi32>
    %3 = vector.broadcast %1 : vector<16x1xi32> to vector<16x16xi32>
    %4 = arith.cmpi eq, %3, %2 : vector<16x16xi32>
    %5 = arith.extui %4 : vector<16x16xi1> to vector<16x16xi32>
    %6 = arith.sitofp %5 : vector<16x16xi32> to vector<16x16xf32>
    %7 = arith.truncf %6 : vector<16x16xf32> to vector<16x16xbf16>
    %c0_3 = arith.constant 0 : index
    %c0_4 = arith.constant 0 : index
    %8 = vector.load %arg4[%c0_3, %c0_4] : memref<96x256xbf16, #tpu.memory_space<vmem>>, vector<96x256xbf16>
    %cst = arith.constant dense<0.000000e+00> : vector<16x256xf32>
    %9 = tpu.matmul %0, %8, %cst {dimension_numbers = #tpu.dot_dimension_numbers<[1], [0], [0], [1], [0, 0, 1, 1], [], []>} : vector<16x96xbf16>, vector<96x256xbf16>, vector<16x256xf32> -> vector<16x256xf32>
    %c0_5 = arith.constant 0 : index
    %c0_6 = arith.constant 0 : index
    %10 = vector.load %arg3[%c0_5, %c0_6] : memref<16x256xbf16, #tpu.memory_space<vmem>>, vector<16x256xbf16>
    %cst_7 = arith.constant dense<0.000000e+00> : vector<16x256xf32>
    %11 = tpu.matmul %7, %10, %cst_7 {dimension_numbers = #tpu.dot_dimension_numbers<[1], [0], [0], [1], [0, 0, 1, 1], [], []>} : vector<16x16xbf16>, vector<16x256xbf16>, vector<16x256xf32> -> vector<16x256xf32>
    %12 = arith.addf %9, %11 : vector<16x256xf32>
    %c0_8 = arith.constant 0 : index
    %c0_9 = arith.constant 0 : index
    %13 = vector.load %arg5[%c0_8, %c0_9] : memref<6x256xf32, #tpu.memory_space<vmem>>, vector<1x256xf32>
    %14 = vector.broadcast %13 : vector<1x256xf32> to vector<16x256xf32>
    %15 = arith.addf %12, %14 : vector<16x256xf32>
    %16 = vector.extract_strided_slice %15 {offsets = [0, 0], sizes = [16, 128], strides = [1, 1]} : vector<16x256xf32> to vector<16x128xf32>
    %17 = vector.extract_strided_slice %15 {offsets = [0, 128], sizes = [16, 128], strides = [1, 1]} : vector<16x256xf32> to vector<16x128xf32>
    %c1 = arith.constant 1 : index
    %c128 = arith.constant 128 : index
    %18 = vector.load %arg5[%c1, %c128] : memref<6x256xf32, #tpu.memory_space<vmem>>, vector<1x128xf32>
    %c2 = arith.constant 2 : index
    %c128_10 = arith.constant 128 : index
    %19 = vector.load %arg5[%c2, %c128_10] : memref<6x256xf32, #tpu.memory_space<vmem>>, vector<1x128xf32>
    %cst_11 = arith.constant dense<0.000000e+00> : vector<16xf32>
    %20 = vector.multi_reduction <add>, %17, %cst_11 [1] : vector<16x128xf32> to vector<16xf32>
    %21 = vector.shape_cast %20 : vector<16xf32> to vector<16x1xf32>
    %cst_12 = arith.constant 1.280000e+02 : f32
    %22 = vector.broadcast %cst_12 : f32 to vector<16x1xf32>
    %23 = arith.divf %21, %22 : vector<16x1xf32>
    %24 = vector.broadcast %23 : vector<16x1xf32> to vector<16x128xf32>
    %25 = arith.subf %17, %24 : vector<16x128xf32>
    %26 = arith.mulf %25, %25 : vector<16x128xf32>
    %cst_13 = arith.constant dense<0.000000e+00> : vector<16xf32>
    %27 = vector.multi_reduction <add>, %26, %cst_13 [1] : vector<16x128xf32> to vector<16xf32>
    %28 = vector.shape_cast %27 : vector<16xf32> to vector<16x1xf32>
    %cst_14 = arith.constant 1.280000e+02 : f32
    %29 = vector.broadcast %cst_14 : f32 to vector<16x1xf32>
    %30 = arith.divf %28, %29 : vector<16x1xf32>
    %31 = vector.broadcast %23 : vector<16x1xf32> to vector<16x128xf32>
    %32 = arith.subf %17, %31 : vector<16x128xf32>
    %cst_15 = arith.constant 9.99999974E-6 : f32
    %33 = vector.broadcast %cst_15 : f32 to vector<16x1xf32>
    %34 = arith.addf %30, %33 : vector<16x1xf32>
    %35 = math.rsqrt %34 : vector<16x1xf32>
    %36 = vector.broadcast %35 : vector<16x1xf32> to vector<16x128xf32>
    %37 = arith.mulf %32, %36 : vector<16x128xf32>
    %38 = vector.broadcast %18 : vector<1x128xf32> to vector<16x128xf32>
    %39 = arith.mulf %37, %38 : vector<16x128xf32>
    %40 = vector.broadcast %19 : vector<1x128xf32> to vector<16x128xf32>
    %41 = arith.addf %39, %40 : vector<16x128xf32>
    %cst_16 = arith.constant 0.000000e+00 : f32
    %42 = vector.broadcast %cst_16 : f32 to vector<16x128xf32>
    %43 = arith.maximumf %41, %42 : vector<16x128xf32>
    %c3 = arith.constant 3 : index
    %c128_17 = arith.constant 128 : index
    %44 = vector.load %arg5[%c3, %c128_17] : memref<6x256xf32, #tpu.memory_space<vmem>>, vector<1x128xf32>
    %45 = vector.broadcast %44 : vector<1x128xf32> to vector<16x128xf32>
    %46 = arith.mulf %43, %45 : vector<16x128xf32>
    %cst_18 = arith.constant dense<0.000000e+00> : vector<16xf32>
    %47 = vector.multi_reduction <add>, %46, %cst_18 [1] : vector<16x128xf32> to vector<16xf32>
    %48 = vector.shape_cast %47 : vector<16xf32> to vector<16x1xf32>
    %c5 = arith.constant 5 : index
    %c0_19 = arith.constant 0 : index
    %49 = vector.load %arg5[%c5, %c0_19] : memref<6x256xf32, #tpu.memory_space<vmem>>, vector<1x1xf32>
    %50 = vector.broadcast %49 : vector<1x1xf32> to vector<16x1xf32>
    %51 = arith.addf %48, %50 : vector<16x1xf32>
    %c0_20 = arith.constant 0 : index
    %c0_21 = arith.constant 0 : index
    %52 = vector.load %arg10[%c0_20, %c0_21] : memref<16x1xf32, #tpu.memory_space<vmem>>, vector<16x1xf32>
    tpu.vector_store %arg10[%c0_20, %c0_21], %51 {strides = array<i32>} : memref<16x1xf32, #tpu.memory_space<vmem>>, vector<16x1xf32>,
    %c1_22 = arith.constant 1 : index
    %c0_23 = arith.constant 0 : index
    %53 = vector.load %arg5[%c1_22, %c0_23] : memref<6x256xf32, #tpu.memory_space<vmem>>, vector<1x128xf32>
    %c2_24 = arith.constant 2 : index
    %c0_25 = arith.constant 0 : index
    %54 = vector.load %arg5[%c2_24, %c0_25] : memref<6x256xf32, #tpu.memory_space<vmem>>, vector<1x128xf32>
    %cst_26 = arith.constant dense<0.000000e+00> : vector<16xf32>
    %55 = vector.multi_reduction <add>, %16, %cst_26 [1] : vector<16x128xf32> to vector<16xf32>
    %56 = vector.shape_cast %55 : vector<16xf32> to vector<16x1xf32>
    %cst_27 = arith.constant 1.280000e+02 : f32
    %57 = vector.broadcast %cst_27 : f32 to vector<16x1xf32>
    %58 = arith.divf %56, %57 : vector<16x1xf32>
    %59 = vector.broadcast %58 : vector<16x1xf32> to vector<16x128xf32>
    %60 = arith.subf %16, %59 : vector<16x128xf32>
    %61 = arith.mulf %60, %60 : vector<16x128xf32>
    %cst_28 = arith.constant dense<0.000000e+00> : vector<16xf32>
    %62 = vector.multi_reduction <add>, %61, %cst_28 [1] : vector<16x128xf32> to vector<16xf32>
    %63 = vector.shape_cast %62 : vector<16xf32> to vector<16x1xf32>
    %cst_29 = arith.constant 1.280000e+02 : f32
    %64 = vector.broadcast %cst_29 : f32 to vector<16x1xf32>
    %65 = arith.divf %63, %64 : vector<16x1xf32>
    %66 = vector.broadcast %58 : vector<16x1xf32> to vector<16x128xf32>
    %67 = arith.subf %16, %66 : vector<16x128xf32>
    %cst_30 = arith.constant 9.99999974E-6 : f32
    %68 = vector.broadcast %cst_30 : f32 to vector<16x1xf32>
    %69 = arith.addf %65, %68 : vector<16x1xf32>
    %70 = math.rsqrt %69 : vector<16x1xf32>
    %71 = vector.broadcast %70 : vector<16x1xf32> to vector<16x128xf32>
    %72 = arith.mulf %67, %71 : vector<16x128xf32>
    %73 = vector.broadcast %53 : vector<1x128xf32> to vector<16x128xf32>
    %74 = arith.mulf %72, %73 : vector<16x128xf32>
    %75 = vector.broadcast %54 : vector<1x128xf32> to vector<16x128xf32>
    %76 = arith.addf %74, %75 : vector<16x128xf32>
    %cst_31 = arith.constant 0.000000e+00 : f32
    %77 = vector.broadcast %cst_31 : f32 to vector<16x128xf32>
    %78 = arith.maximumf %76, %77 : vector<16x128xf32>
    %79 = arith.truncf %78 : vector<16x128xf32> to vector<16x128xbf16>
    %c0_32 = arith.constant 0 : index
    %c0_33 = arith.constant 0 : index
    %80 = vector.load %arg6[%c0_32, %c0_33] : memref<128x128xbf16, #tpu.memory_space<vmem>>, vector<128x128xbf16>
    %cst_34 = arith.constant dense<0.000000e+00> : vector<16x128xf32>
    %81 = tpu.matmul %79, %80, %cst_34 {dimension_numbers = #tpu.dot_dimension_numbers<[1], [0], [0], [1], [0, 0, 1, 1], [], []>} : vector<16x128xbf16>, vector<128x128xbf16>, vector<16x128xf32> -> vector<16x128xf32>
    %c3_35 = arith.constant 3 : index
    %c0_36 = arith.constant 0 : index
    %82 = vector.load %arg5[%c3_35, %c0_36] : memref<6x256xf32, #tpu.memory_space<vmem>>, vector<1x128xf32>
    %83 = vector.broadcast %82 : vector<1x128xf32> to vector<16x128xf32>
    %84 = arith.addf %81, %83 : vector<16x128xf32>
    %c4 = arith.constant 4 : index
    %c0_37 = arith.constant 0 : index
    %85 = vector.load %arg5[%c4, %c0_37] : memref<6x256xf32, #tpu.memory_space<vmem>>, vector<1x128xf32>
    %c4_38 = arith.constant 4 : index
    %c128_39 = arith.constant 128 : index
    %86 = vector.load %arg5[%c4_38, %c128_39] : memref<6x256xf32, #tpu.memory_space<vmem>>, vector<1x128xf32>
    %cst_40 = arith.constant dense<0.000000e+00> : vector<16xf32>
    %87 = vector.multi_reduction <add>, %84, %cst_40 [1] : vector<16x128xf32> to vector<16xf32>
    %88 = vector.shape_cast %87 : vector<16xf32> to vector<16x1xf32>
    %cst_41 = arith.constant 1.280000e+02 : f32
    %89 = vector.broadcast %cst_41 : f32 to vector<16x1xf32>
    %90 = arith.divf %88, %89 : vector<16x1xf32>
    %91 = vector.broadcast %90 : vector<16x1xf32> to vector<16x128xf32>
    %92 = arith.subf %84, %91 : vector<16x128xf32>
    %93 = arith.mulf %92, %92 : vector<16x128xf32>
    %cst_42 = arith.constant dense<0.000000e+00> : vector<16xf32>
    %94 = vector.multi_reduction <add>, %93, %cst_42 [1] : vector<16x128xf32> to vector<16xf32>
    %95 = vector.shape_cast %94 : vector<16xf32> to vector<16x1xf32>
    %cst_43 = arith.constant 1.280000e+02 : f32
    %96 = vector.broadcast %cst_43 : f32 to vector<16x1xf32>
    %97 = arith.divf %95, %96 : vector<16x1xf32>
    %98 = vector.broadcast %90 : vector<16x1xf32> to vector<16x128xf32>
    %99 = arith.subf %84, %98 : vector<16x128xf32>
    %cst_44 = arith.constant 9.99999974E-6 : f32
    %100 = vector.broadcast %cst_44 : f32 to vector<16x1xf32>
    %101 = arith.addf %97, %100 : vector<16x1xf32>
    %102 = math.rsqrt %101 : vector<16x1xf32>
    %103 = vector.broadcast %102 : vector<16x1xf32> to vector<16x128xf32>
    %104 = arith.mulf %99, %103 : vector<16x128xf32>
    %105 = vector.broadcast %85 : vector<1x128xf32> to vector<16x128xf32>
    %106 = arith.mulf %104, %105 : vector<16x128xf32>
    %107 = vector.broadcast %86 : vector<1x128xf32> to vector<16x128xf32>
    %108 = arith.addf %106, %107 : vector<16x128xf32>
    %cst_45 = arith.constant 0.000000e+00 : f32
    %109 = vector.broadcast %cst_45 : f32 to vector<16x128xf32>
    %110 = arith.maximumf %108, %109 : vector<16x128xf32>
    %111 = arith.truncf %110 : vector<16x128xf32> to vector<16x128xbf16>
    %c0_46 = arith.constant 0 : index
    %c0_47 = arith.constant 0 : index
    %112 = vector.load %arg7[%c0_46, %c0_47] : memref<128x384xbf16, #tpu.memory_space<vmem>>, vector<128x384xbf16>
    %cst_48 = arith.constant dense<0.000000e+00> : vector<16x384xf32>
    %113 = tpu.matmul %111, %112, %cst_48 {dimension_numbers = #tpu.dot_dimension_numbers<[1], [0], [0], [1], [0, 0, 1, 1], [], []>} : vector<16x128xbf16>, vector<128x384xbf16>, vector<16x384xf32> -> vector<16x384xf32>
    %c0_49 = arith.constant 0 : index
    %c0_50 = arith.constant 0 : index
    %114 = vector.load %arg8[%c0_49, %c0_50] : memref<1x384xf32, #tpu.memory_space<vmem>>, vector<1x384xf32>
    %115 = vector.broadcast %114 : vector<1x384xf32> to vector<16x384xf32>
    %116 = arith.addf %113, %115 : vector<16x384xf32>
    %c0_51 = arith.constant 0 : index
    %c0_52 = arith.constant 0 : index
    %117 = vector.load %arg9[%c0_51, %c0_52] : memref<16x384xf32, #tpu.memory_space<vmem>>, vector<16x384xf32>
    tpu.vector_store %arg9[%c0_51, %c0_52], %116 {strides = array<i32>} : memref<16x384xf32, #tpu.memory_space<vmem>>, vector<16x384xf32>,
    return
  }
  func.func @transform_0(%arg0: i32) -> (i32, i32) {
    %c0_i32 = arith.constant 0 : i32
    %c0_i32_0 = arith.constant 0 : i32
    return %arg0, %c0_i32 : i32, i32
  }
  func.func @transform_1(%arg0: i32) -> (i32, i32) {
    %c0_i32 = arith.constant 0 : i32
    %c0_i32_0 = arith.constant 0 : i32
    return %arg0, %c0_i32 : i32, i32
  }
  func.func @transform_2(%arg0: i32) -> (i32, i32) {
    %c0_i32 = arith.constant 0 : i32
    %c0_i32_0 = arith.constant 0 : i32
    %c0_i32_1 = arith.constant 0 : i32
    return %c0_i32, %c0_i32_0 : i32, i32
  }
  func.func @transform_3(%arg0: i32) -> (i32, i32) {
    %c0_i32 = arith.constant 0 : i32
    %c0_i32_0 = arith.constant 0 : i32
    %c0_i32_1 = arith.constant 0 : i32
    return %c0_i32, %c0_i32_0 : i32, i32
  }
  func.func @transform_4(%arg0: i32) -> (i32, i32) {
    %c0_i32 = arith.constant 0 : i32
    %c0_i32_0 = arith.constant 0 : i32
    %c0_i32_1 = arith.constant 0 : i32
    return %c0_i32, %c0_i32_0 : i32, i32
  }
  func.func @transform_5(%arg0: i32) -> (i32, i32) {
    %c0_i32 = arith.constant 0 : i32
    %c0_i32_0 = arith.constant 0 : i32
    %c0_i32_1 = arith.constant 0 : i32
    return %c0_i32, %c0_i32_0 : i32, i32
  }
  func.func @transform_6(%arg0: i32) -> (i32, i32) {
    %c0_i32 = arith.constant 0 : i32
    %c0_i32_0 = arith.constant 0 : i32
    %c0_i32_1 = arith.constant 0 : i32
    return %c0_i32, %c0_i32_0 : i32, i32
  }
  func.func @transform_7(%arg0: i32) -> (i32, i32) {
    %c0_i32 = arith.constant 0 : i32
    %c0_i32_0 = arith.constant 0 : i32
    %c0_i32_1 = arith.constant 0 : i32
    return %c0_i32, %c0_i32_0 : i32, i32
  }
  func.func @transform_8(%arg0: i32) -> (i32, i32) {
    %c0_i32 = arith.constant 0 : i32
    %c0_i32_0 = arith.constant 0 : i32
    return %arg0, %c0_i32 : i32, i32
  }
  func.func @transform_9(%arg0: i32) -> (i32, i32) {
    %c0_i32 = arith.constant 0 : i32
    %c0_i32_0 = arith.constant 0 : i32
    return %arg0, %c0_i32 : i32, i32
  }
}

</mosaic_0001>

<llo_original>
// kernel: edge_model_forward.5
$region0: #{edge_model_forward.5}
  #allocation0 [shape = 'u32[]', space=smem, size = 0x4, offset = 0x4, fixed_abs, tag = 'smem constant byte address 0x4 - core index']
  #allocation1 [shape = 'u32[144,128]{1,0:T(1,128)}', space=vmem, size = 0x12000, scoped, tag = 'internal scratch']
  %s0 = inlined_call_operand.vmem [shape: s32[16,1], index: 0, kind: input, shape index: {}]
  %s1 = inlined_call_operand.vmem [shape: f32[16,1], index: 1, kind: input, shape index: {}]
  %s2 = inlined_call_operand.vmem [shape: f32[2,16], index: 2, kind: input, shape index: {}]
  %s3 = inlined_call_operand.vmem [shape: f32[16,1], index: 3, kind: output, shape index: {}]
  %s4 = sld [smem:[#allocation0]]
  $region22: #{edge_model_forward.5} parent=0
    _
  %s6 = ssub.s32 1, %s4
  %s7 = scalar_select 0, %s6, %s4
  // Predicated region
  $region2: #{edge_model_forward.5} parent=0 // pred_check
    _
  $region3: #{edge_model_forward.5} parent=0 // pred_check_branch
    %9 = sbr.rel (0) target = $region5
  $region4: #{edge_model_forward.5} parent=0 // pred_region
    _
  $region5: #{edge_model_forward.5} parent=0 // pred_fallthru
    _
  // Predicated region
  $region6: #{edge_model_forward.5} parent=0 // pred_check
    _
  $region7: #{edge_model_forward.5} parent=0 // pred_check_branch
    %11 = sbr.rel (0) target = $region9
  $region8: #{edge_model_forward.5} parent=0 // pred_region
    _
  $region9: #{edge_model_forward.5} parent=0 // pred_fallthru
    _
  // Predicated region
  $region10: #{edge_model_forward.5} parent=0 // pred_check
    _
  $region11: #{edge_model_forward.5} parent=0 // pred_check_branch
    %13 = sbr.rel (0) target = $region13
  $region12: #{edge_model_forward.5} parent=0 // pred_region
    _
  $region13: #{edge_model_forward.5} parent=0 // pred_fallthru
    _
  %v14 = vld [vmem:[%s0] sm:$0xff]
  %v15 = vld [vmem:[%s0 + $0x8] sm:$0xff]
  %v16 = vld [vmem:[%s1] sm:$0xff]
  %v17 = vld [vmem:[%s1 + $0x8] sm:$0xff]
  %v18 = vlaneseq
  %v19 = vand.u32 %v18, 127
  %20 = vset.pattern.permute.xlu0 0
  %21 = vperm.xlu0 %20, %v14
  %v22 = vpop.permute.xlu0 %21
  %23 = vset.pattern.permute.xlu0 0
  %24 = vperm.xlu0 %23, %v15
  %v25 = vpop.permute.xlu0 %24
  %vm26 = vcmp.eq.s32.totalorder %v22, %v19
  %vm27 = vcmp.eq.s32.totalorder %v25, %v19
  %v28 = vsel %vm26, 1, 0
  %v29 = vsel %vm27, 1, 0
  %v30 = vcvt.s32.f32 %v28
  %v31 = vcvt.s32.f32 %v29
  %v32 = vld [vmem:[%s2] sm:$0x1]
  %v33 = vld [vmem:[%s2 + $0x1] sm:$0x1]
  %vm34 = vcmp.gt.f32.partialorder %v33, 0.0
  %v35 = vrcp.pop %v33
  %v36 = vmul.f32 1.0, %v35
  %v37 = vsel %vm34, %v36, 0.0
  %v38 = vlaneseq
  %v39 = vshrl.u32 %v38, 7
  %v40 = vsub.s32 0, %v39
  %v41 = vrot.slane %v32, %v40
  %v42 = vmul.f32 %v30, %v41
  %v43 = vmul.f32 %v31, %v41
  %vm44 = vcmask 130048
  %v45 = vsel %vm44, %v42, 0.0
  %46 = vadd.xlane.f32.xlu0 %v45
  %v47 = vpop.xlane.xlu0 %46
  %v48 = vsel %vm44, %v43, 0.0
  %49 = vadd.xlane.f32.xlu0 %v48
  %v50 = vpop.xlane.xlu0 %49
  %v51 = vlaneseq
  %v52 = vshrl.u32 %v51, 7
  %v53 = vsub.s32 0, %v52
  %v54 = vrot.slane %v37, %v53
  %v55 = vmul.f32 %v30, %v54
  %v56 = vmul.f32 %v31, %v54
  %v57 = vsel %vm44, %v55, 0.0
  %58 = vadd.xlane.f32.xlu0 %v57
  %v59 = vpop.xlane.xlu0 %58
  %v60 = vsel %vm44, %v56, 0.0
  %61 = vadd.xlane.f32.xlu0 %v60
  %v62 = vpop.xlane.xlu0 %61
  %vm63 = vcmp.gt.f32.partialorder %v59, 0.0
  %vm64 = vcmp.gt.f32.partialorder %v62, 0.0
  %v65 = vsub.f32 %v16, %v47
  %v66 = vsub.f32 %v17, %v50
  %v67 = vmul.f32 %v65, 1.442695
  %v68 = vpow.pop %v67
  %v69 = vmul.f32 %v66, 1.442695
  %v70 = vpow.pop %v69
  %v71 = vmul.f32 %v68, %v59
  %v72 = vmul.f32 %v70, %v62
  %v73 = vsel %vm63, %v71, 0.0
  %v74 = vsel %vm64, %v72, 0.0
  %vm75 = vcmask 7168
  %76 = vst.msk [vmem:[%s3] sm:$0xff] %vm75, %v73
  %77 = vst.msk [vmem:[%s3 + $0x8] sm:$0xff] %vm75, %v74
  // Predicated region
  $region14: #{edge_model_forward.5} parent=0 // pred_check
    _
  $region15: #{edge_model_forward.5} parent=0 // pred_check_branch
    %79 = sbr.rel (0) target = $region17
  $region16: #{edge_model_forward.5} parent=0 // pred_region
    _
  $region17: #{edge_model_forward.5} parent=0 // pred_fallthru
    _
  // Predicated region
  $region18: #{edge_model_forward.5} parent=0 // pred_check
    _
  $region19: #{edge_model_forward.5} parent=0 // pred_check_branch
    %81 = sbr.rel (0) target = $region21
  $region20: #{edge_model_forward.5} parent=0 // pred_region
    _
  $region21: #{edge_model_forward.5} parent=0 // pred_fallthru
    _

// kernel: edge_model_forward.4
$region0: #{edge_model_forward.4}
  #allocation0 [shape = 'u32[]', space=smem, size = 0x4, offset = 0x4, fixed_abs, tag = 'smem constant byte address 0x4 - core index']
  #allocation1 [shape = 'u32[144,128]{1,0:T(1,128)}', space=vmem, size = 0x12000, scoped, tag = 'internal scratch']
  %s0 = inlined_call_operand.vmem [shape: s32[16,1], index: 0, kind: input, shape index: {}]
  %s1 = inlined_call_operand.vmem [shape: f32[16,1], index: 1, kind: input, shape index: {}]
  %s2 = inlined_call_operand.vmem [shape: f32[2,16], index: 2, kind: output, shape index: {}]
  %s3 = sld [smem:[#allocation0]]
  $region22: #{edge_model_forward.4} parent=0
    _
  %s5 = ssub.s32 1, %s3
  %s6 = scalar_select 0, %s5, %s3
  // Predicated region
  $region2: #{edge_model_forward.4} parent=0 // pred_check
    _
  $region3: #{edge_model_forward.4} parent=0 // pred_check_branch
    %8 = sbr.rel (0) target = $region5
  $region4: #{edge_model_forward.4} parent=0 // pred_region
    _
  $region5: #{edge_model_forward.4} parent=0 // pred_fallthru
    _
  // Predicated region
  $region6: #{edge_model_forward.4} parent=0 // pred_check
    _
  $region7: #{edge_model_forward.4} parent=0 // pred_check_branch
    %10 = sbr.rel (0) target = $region9
  $region8: #{edge_model_forward.4} parent=0 // pred_region
    _
  $region9: #{edge_model_forward.4} parent=0 // pred_fallthru
    _
  %p11 = scmp.eq.s32.totalorder 0, 0
  // Predicated region
  $region10: #{edge_model_forward.4} parent=0 // pred_check
    %p12 = pneg %p11
  $region11: #{edge_model_forward.4} parent=0 // pred_check_branch
    %14 = sbr.rel (%p12) target = $region13
  $region12: #{edge_model_forward.4} parent=0 // pred_region
    %vm15 = vcmask 122880
    %16 = vst.msk [vmem:[%s2] sm:$0x1] %vm15, -1e+30
    %17 = vst.msk [vmem:[%s2 + $0x1] sm:$0x1] %vm15, 0.0
  $region13: #{edge_model_forward.4} parent=0 // pred_fallthru
    _
  %v18 = vld [vmem:[%s0] sm:$0xff]
  %v19 = vld [vmem:[%s0 + $0x8] sm:$0xff]
  %v20 = vld [vmem:[%s1] sm:$0xff]
  %v21 = vld [vmem:[%s1 + $0x8] sm:$0xff]
  %v22 = vlaneseq
  %v23 = vand.u32 %v22, 127
  %24 = vset.pattern.permute.xlu0 0
  %25 = vperm.xlu0 %24, %v18
  %v26 = vpop.permute.xlu0 %25
  %27 = vset.pattern.permute.xlu0 0
  %28 = vperm.xlu0 %27, %v19
  %v29 = vpop.permute.xlu0 %28
  %vm30 = vcmp.eq.s32.totalorder %v26, %v23
  %vm31 = vcmp.eq.s32.totalorder %v29, %v23
  %v32 = vld [vmem:[%s2] sm:$0x1]
  %v33 = vld [vmem:[%s2 + $0x1] sm:$0x1]
  %35 = vset.pattern.permute.xlu0 0
  %36 = vperm.xlu0 %35, %v20
  %v37 = vpop.permute.xlu0 %36
  %40 = vset.pattern.permute.xlu0 0
  %41 = vperm.xlu0 %40, %v21
  %v42 = vpop.permute.xlu0 %41
  %v44 = vsel %vm30, %v37, -1e+30
  %v45 = vsel %vm31, %v42, -1e+30
  %vm46 = vcmask 130048
  %v47 = vsel %vm46, %v44, -inf
  %v48 = vsel %vm46, %v45, -inf
  %v49 = vmax.f32 %v47, %v48
  %v50 = vrot.slane %v49, 4
  %v51 = vmax.f32 %v49, %v50
  %v52 = vrot.slane %v51, 2
  %v53 = vmax.f32 %v51, %v52
  %v54 = vrot.slane %v53, 1
  %v55 = vmax.f32 %v53, %v54
  %v56 = vmax.f32 %v32, %v55
  %v57 = vlaneseq
  %v58 = vshrl.u32 %v57, 7
  %v59 = vsub.s32 0, %v58
  %v60 = vrot.slane %v56, %v59
  %v61 = vsub.f32 %v37, %v60
  %v62 = vsub.f32 %v42, %v60
  %v63 = vmul.f32 %v61, 1.442695
  %v64 = vpow.pop %v63
  %v65 = vmul.f32 %v62, 1.442695
  %v66 = vpow.pop %v65
  %v67 = vsel %vm30, %v64, 0.0
  %v68 = vsel %vm31, %v66, 0.0
  %v69 = vsub.f32 %v32, %v56
  %v70 = vmul.f32 %v69, 1.442695
  %v71 = vpow.pop %v70
  %v72 = vmul.f32 %v33, %v71
  %v73 = vsel %vm46, %v67, 0.0
  %v74 = vsel %vm46, %v68, 0.0
  %v75 = vadd.f32 %v73, %v74
  %v76 = vrot.slane %v75, 4
  %v77 = vadd.f32 %v75, %v76
  %v78 = vrot.slane %v77, 2
  %v79 = vadd.f32 %v77, %v78
  %v80 = vrot.slane %v79, 1
  %v81 = vadd.f32 %v79, %v80
  %v82 = vadd.f32 %v72, %v81
  %vm83 = vcmask 122880
  %84 = vst.msk [vmem:[%s2] sm:$0x1] %vm83, %v56
  %85 = vst.msk [vmem:[%s2 + $0x1] sm:$0x1] %vm83, %v82
  // Predicated region
  $region14: #{edge_model_forward.4} parent=0 // pred_check
    _
  $region15: #{edge_model_forward.4} parent=0 // pred_check_branch
    %87 = sbr.rel (0) target = $region17
  $region16: #{edge_model_forward.4} parent=0 // pred_region
    _
  $region17: #{edge_model_forward.4} parent=0 // pred_fallthru
    _
  // Predicated region
  $region18: #{edge_model_forward.4} parent=0 // pred_check
    _
  $region19: #{edge_model_forward.4} parent=0 // pred_check_branch
    %89 = sbr.rel (0) target = $region21
  $region20: #{edge_model_forward.4} parent=0 // pred_region
    _
  $region21: #{edge_model_forward.4} parent=0 // pred_fallthru
    _

// kernel: edge_model_forward.3
$region0: #{edge_model_forward.3}
  #allocation0 [shape = 'u32[]', space=smem, size = 0x4, offset = 0x4, fixed_abs, tag = 'smem constant byte address 0x4 - core index']
  #allocation1 [shape = 'u32[144,128]{1,0:T(1,128)}', space=vmem, size = 0x12000, scoped, tag = 'internal scratch']
  %s0 = inlined_call_operand.vmem [shape: bf16[16,96], index: 0, kind: input, shape index: {}]
  %s1 = inlined_call_operand.vmem [shape: s32[16,1], index: 1, kind: input, shape index: {}]
  %s2 = inlined_call_operand.vmem [shape: bf16[16,256], index: 2, kind: input, shape index: {}]
  %s3 = inlined_call_operand.hbm [shape: bf16[96,256], index: 3, kind: input, shape index: {}]
  %s4 = inlined_call_operand.hbm [shape: f32[6,256], index: 4, kind: input, shape index: {}]
  %s5 = inlined_call_operand.hbm [shape: bf16[128,128], index: 5, kind: input, shape index: {}]
  %s6 = inlined_call_operand.vmem [shape: bf16[128,384], index: 6, kind: input, shape index: {}]
  %s7 = inlined_call_operand.vmem [shape: f32[1,384], index: 7, kind: input, shape index: {}]
  %s8 = inlined_call_operand.hbm [shape: f32[16,384], index: 8, kind: output, shape index: {0}]
  %s9 = inlined_call_operand.vmem [shape: f32[16,1], index: 9, kind: output, shape index: {1}]
  %10 = xla_tuple %s8, %s9
  %s11 = sld [smem:[#allocation0]]
  $region62: #{edge_model_forward.3} parent=0
    _
  %s13 = ssub.s32 1, %s11
  %s14 = scalar_select 0, %s13, %s11
  $region1: #{edge_model_forward.3} parent=0
    #allocation2 [shape = 'u8[49152]{0}', space=vmem, size = 0xc000, scoped, tag = 'input window, operand 3, single buffered']
    #allocation3 [shape = 's32[1]{0}', space=sflag, size = 0x4, scoped, tag = 'scoped memory for edge_model_forward.3']
    #allocation4 [shape = 's32[1]{0}', space=sflag, size = 0x4, scoped, tag = 'scoped memory for edge_model_forward.3']
    #allocation5 [shape = 'u8[8192]{0}', space=vmem, size = 0x2000, scoped, tag = 'input window, operand 4, single buffered']
    #allocation6 [shape = 's32[1]{0}', space=sflag, size = 0x4, scoped, tag = 'scoped memory for edge_model_forward.3']
    #allocation7 [shape = 'u8[32768]{0}', space=vmem, size = 0x8000, scoped, tag = 'input window, operand 5, single buffered']
    #allocation8 [shape = 'u8[24576]{0}', space=vmem, size = 0x6000, scoped, tag = 'output window, operand 0, single buffered']
    %15 = vsyncpa [#allocation3], 0
    %16 = vsyncpa [#allocation6], 0
    %17 = vsyncpa [#allocation4], 0
    // Predicated region
    $region2: #{edge_model_forward.3} parent=1 // pred_check
      _
    $region3: #{edge_model_forward.3} parent=1 // pred_check_branch
      %19 = sbr.rel (0) target = $region5
    $region4: #{edge_model_forward.3} parent=1 // pred_region
      _
    $region5: #{edge_model_forward.3} parent=1 // pred_fallthru
      _
    // Predicated region
    $region6: #{edge_model_forward.3} parent=1 // pred_check
      _
    $region7: #{edge_model_forward.3} parent=1 // pred_check_branch
      %21 = sbr.rel (0) target = $region9
    $region8: #{edge_model_forward.3} parent=1 // pred_region
      _
    $region9: #{edge_model_forward.3} parent=1 // pred_fallthru
      _
    // Predicated region
    $region10: #{edge_model_forward.3} parent=1 // pred_check
      _
    $region11: #{edge_model_forward.3} parent=1 // pred_check_branch
      %23 = sbr.rel (0) target = $region13
    $region12: #{edge_model_forward.3} parent=1 // pred_region
      _
    $region13: #{edge_model_forward.3} parent=1 // pred_fallthru
      _
    // Predicated region
    $region14: #{edge_model_forward.3} parent=1 // pred_check
      _
    $region15: #{edge_model_forward.3} parent=1 // pred_check_branch
      %25 = sbr.rel (0) target = $region17
    $region16: #{edge_model_forward.3} parent=1 // pred_region
      %s27 = ssub.s32 1536, 1536
      %28 = vsyncadd [#allocation3], %s27
      %s29 = sshll.u32 [#allocation2], 4
      %s30 = int_to_ptr.vmem [resolvable:$true] %s29
      %35 = dma.hbm_to_vmem [thread:$0]  %s3, 1536, %s30, [#allocation3], 128, 128, 8
    $region17: #{edge_model_forward.3} parent=1 // pred_fallthru
      _
    // Predicated region
    $region18: #{edge_model_forward.3} parent=1 // pred_check
      _
    $region19: #{edge_model_forward.3} parent=1 // pred_check_branch
      %37 = sbr.rel (0) target = $region21
    $region20: #{edge_model_forward.3} parent=1 // pred_region
      %s39 = ssub.s32 256, 256
      %40 = vsyncadd [#allocation6], %s39
      %s42 = sshll.u32 [#allocation5], 4
      %s43 = int_to_ptr.vmem [resolvable:$true] %s42
      %45 = dma.hbm_to_vmem [thread:$0]  %s4, 256, %s43, [#allocation6]
    $region21: #{edge_model_forward.3} parent=1 // pred_fallthru
      _
    // Predicated region
    $region22: #{edge_model_forward.3} parent=1 // pred_check
      _
    $region23: #{edge_model_forward.3} parent=1 // pred_check_branch
      %47 = sbr.rel (0) target = $region25
    $region24: #{edge_model_forward.3} parent=1 // pred_region
      %s49 = ssub.s32 1024, 1024
      %50 = vsyncadd [#allocation6], %s49
      %s51 = sshll.u32 [#allocation7], 4
      %s52 = int_to_ptr.vmem [resolvable:$true] %s51
      %57 = dma.hbm_to_vmem [thread:$0]  %s5, 1024, %s52, [#allocation6], 64, 64, 4
    $region25: #{edge_model_forward.3} parent=1 // pred_fallthru
      _
    // Predicated region
    $region26: #{edge_model_forward.3} parent=1 // pred_check
      _
    $region27: #{edge_model_forward.3} parent=1 // pred_check_branch
      %59 = sbr.rel (0) target = $region29
    $region28: #{edge_model_forward.3} parent=1 // pred_region
      _
    $region29: #{edge_model_forward.3} parent=1 // pred_fallthru
      _
    // Predicated region
    $region30: #{edge_model_forward.3} parent=1 // pred_check
      _
    $region31: #{edge_model_forward.3} parent=1 // pred_check_branch
      %61 = sbr.rel (0) target = $region33
    $region32: #{edge_model_forward.3} parent=1 // pred_region
      _
    $region33: #{edge_model_forward.3} parent=1 // pred_fallthru
      _
    // Predicated region
    $region34: #{edge_model_forward.3} parent=1 // pred_check
      _
    $region35: #{edge_model_forward.3} parent=1 // pred_check_branch
      %63 = sbr.rel (0) target = $region37
    $region36: #{edge_model_forward.3} parent=1 // pred_region
      %64 = dma.done [#allocation3], 1536
    $region37: #{edge_model_forward.3} parent=1 // pred_fallthru
      _
    // Predicated region
    $region38: #{edge_model_forward.3} parent=1 // pred_check
      _
    $region39: #{edge_model_forward.3} parent=1 // pred_check_branch
      %66 = sbr.rel (0) target = $region41
    $region40: #{edge_model_forward.3} parent=1 // pred_region
      %67 = dma.done [#allocation6], 256
    $region41: #{edge_model_forward.3} parent=1 // pred_fallthru
      _
    // Predicated region
    $region42: #{edge_model_forward.3} parent=1 // pred_check
      _
    $region43: #{edge_model_forward.3} parent=1 // pred_check_branch
      %69 = sbr.rel (0) target = $region45
    $region44: #{edge_model_forward.3} parent=1 // pred_region
      %70 = dma.done [#allocation6], 1024
    $region45: #{edge_model_forward.3} parent=1 // pred_fallthru
      _
    %v72 = vld [vmem:[%s0] sm:$0xf]
    %v73 = vld [vmem:[%s0 + $0x4] sm:$0xf]
    %v74 = vld [vmem:[%s1] sm:$0xff]
    %v75 = vld [vmem:[%s1 + $0x8] sm:$0xff]
    %v76 = vlaneseq
    %v77 = vand.u32 %v76, 127
    %78 = vset.pattern.permute.xlu0 0
    %79 = vperm.xlu0 %78, %v74
    %v80 = vpop.permute.xlu0 %79
    %81 = vset.pattern.permute.xlu0 0
    %82 = vperm.xlu0 %81, %v75
    %v83 = vpop.permute.xlu0 %82
    %vm84 = vcmp.eq.s32.totalorder %v80, %v77
    %vm85 = vcmp.eq.s32.totalorder %v83, %v77
    %v86 = vsel %vm84, 1, 0
    %v87 = vsel %vm85, 1, 0
    %v88 = vcvt.s32.f32 %v86
    %v89 = vcvt.s32.f32 %v87
    %v90 = vpack.c.bf16 %v89, %v88
    %v91 = vld [vmem:[#allocation2] sm:$0xff]
    %v92 = vld [vmem:[#allocation2 + $0x8] sm:$0xff]
    %v93 = vld [vmem:[#allocation2 + $0x10] sm:$0xff]
    %v94 = vld [vmem:[#allocation2 + $0x18] sm:$0xff]
    %v95 = vld [vmem:[#allocation2 + $0x20] sm:$0xff]
    %v96 = vld [vmem:[#allocation2 + $0x28] sm:$0xff]
    %v97 = vld [vmem:[#allocation2 + $0x30] sm:$0xff]
    %v98 = vld [vmem:[#allocation2 + $0x38] sm:$0xff]
    %v99 = vld [vmem:[#allocation2 + $0x40] sm:$0xff]
    %v100 = vld [vmem:[#allocation2 + $0x48] sm:$0xff]
    %v101 = vld [vmem:[#allocation2 + $0x50] sm:$0xff]
    %v102 = vld [vmem:[#allocation2 + $0x58] sm:$0xff]
    %v103 = vld [vmem:[%s2] sm:$0xff]
    %v104 = vld [vmem:[%s2 + $0x8] sm:$0xff]
    %v107 = vunpack.c.l.b16 %v103
    %v108 = vunpack.c.h.b16 %v103
    %v109 = vunpack.c.l.b16 %v104
    %v110 = vunpack.c.h.b16 %v104
    %v111 = vpack.c.b16 %v109, %v107
    %v112 = vpack.c.b16 %v110, %v108
    %vm115 = vcmask 130048
    %v117 = vsel %vm115, %v90, 0
    %119 = vmatprep.subr.bf16.mxu0 %v112
    %120 = vmatpush1.bf16.msra.mxu0 %v111
    %121 = vmatprep.subr.bf16.mxu0 0
    %122 = vmatpush1.bf16.msra.mxu0 0
    %123 = vmatprep.subr.bf16.mxu0 0
    %124 = vmatpush1.bf16.msra.mxu0 0
    %125 = vmatprep.subr.bf16.mxu0 0
    %126 = vmatpush1.bf16.msra.mxu0 0
    %127 = vmatprep.subr.bf16.mxu0 0
    %128 = vmatpush1.bf16.msra.mxu0 0
    %129 = vmatprep.subr.bf16.mxu0 0
    %130 = vmatpush1.bf16.msra.mxu0 0
    %131 = vmatprep.subr.bf16.mxu0 0
    %132 = vmatpush1.bf16.msra.mxu0 0
    %133 = vmatprep.subr.bf16.mxu0 0
    %134 = vmatpush1.bf16.msra.mxu0 0
    %135 = vmatprep.subr.bf16.mxu0 0
    %136 = vmatpush1.bf16.msra.mxu0 0
    %137 = vmatprep.subr.bf16.mxu0 0
    %138 = vmatpush1.bf16.msra.mxu0 0
    %139 = vmatprep.subr.bf16.mxu0 0
    %140 = vmatpush1.bf16.msra.mxu0 0
    %141 = vmatprep.subr.bf16.mxu0 0
    %142 = vmatpush1.bf16.msra.mxu0 0
    %143 = vmatprep.subr.bf16.mxu0 0
    %144 = vmatpush1.bf16.msra.mxu0 0
    %145 = vmatprep.subr.bf16.mxu0 0
    %146 = vmatpush1.bf16.msra.mxu0 0
    %147 = vmatprep.subr.bf16.mxu0 0
    %148 = vmatpush1.bf16.msra.mxu0 0
    %149 = vmatprep.subr.bf16.mxu0 0
    %150 = vmatpush1.bf16.msra.mxu0 0
    %151 = vmatprep.mubr.bf16.mxu0 0
    %152 = vmatmul.mubr.bf16.gmra.mrb[0].mxu0 %v117
    %v153 = vpop.f32.mrb[0].mxu0
    %v154 = vadd.f32 0.0, %v153
    %v155 = vpop.f32.mrb[0].mxu0
    %v156 = vadd.f32 0.0, %v155
    %v157 = vpop.f32.mrb[0].mxu0
    %v158 = vadd.f32 0.0, %v157
    %v159 = vpop.f32.mrb[0].mxu0
    %v160 = vadd.f32 0.0, %v159
    %161 = vdwg.mxu0
    %v164 = vunpack.c.l.b16 %v72
    %v165 = vunpack.c.l.b16 %v73
    %v166 = vpack.c.b16 %v165, %v164
    %v179 = vunpack.c.l.b16 %v91
    %v180 = vunpack.c.h.b16 %v91
    %v181 = vunpack.c.l.b16 %v92
    %v182 = vunpack.c.h.b16 %v92
    %v183 = vunpack.c.l.b16 %v93
    %v184 = vunpack.c.h.b16 %v93
    %v185 = vunpack.c.l.b16 %v94
    %v186 = vunpack.c.h.b16 %v94
    %v187 = vunpack.c.l.b16 %v95
    %v188 = vunpack.c.h.b16 %v95
    %v189 = vunpack.c.l.b16 %v96
    %v190 = vunpack.c.h.b16 %v96
    %v191 = vunpack.c.l.b16 %v97
    %v192 = vunpack.c.h.b16 %v97
    %v193 = vunpack.c.l.b16 %v98
    %v194 = vunpack.c.h.b16 %v98
    %v195 = vunpack.c.l.b16 %v99
    %v196 = vunpack.c.h.b16 %v99
    %v197 = vunpack.c.l.b16 %v100
    %v198 = vunpack.c.h.b16 %v100
    %v199 = vunpack.c.l.b16 %v101
    %v200 = vunpack.c.h.b16 %v101
    %v201 = vunpack.c.l.b16 %v102
    %v202 = vunpack.c.h.b16 %v102
    %v203 = vpack.c.b16 %v181, %v179
    %v204 = vpack.c.b16 %v182, %v180
    %v205 = vpack.c.b16 %v185, %v183
    %v206 = vpack.c.b16 %v186, %v184
    %v207 = vpack.c.b16 %v189, %v187
    %v208 = vpack.c.b16 %v190, %v188
    %v209 = vpack.c.b16 %v193, %v191
    %v210 = vpack.c.b16 %v194, %v192
    %v211 = vpack.c.b16 %v197, %v195
    %v212 = vpack.c.b16 %v198, %v196
    %v213 = vpack.c.b16 %v201, %v199
    %v214 = vpack.c.b16 %v202, %v200
    %vm227 = vcmask 785408
    %v229 = vsel %vm227, %v166, 0
    %231 = vmatprep.subr.bf16.mxu0 %v204
    %232 = vmatpush1.bf16.msra.mxu0 %v203
    %233 = vmatprep.subr.bf16.mxu0 %v206
    %234 = vmatpush1.bf16.msra.mxu0 %v205
    %235 = vmatprep.subr.bf16.mxu0 %v208
    %236 = vmatpush1.bf16.msra.mxu0 %v207
    %237 = vmatprep.subr.bf16.mxu0 %v210
    %238 = vmatpush1.bf16.msra.mxu0 %v209
    %239 = vmatprep.subr.bf16.mxu0 %v212
    %240 = vmatpush1.bf16.msra.mxu0 %v211
    %241 = vmatprep.subr.bf16.mxu0 %v214
    %242 = vmatpush1.bf16.msra.mxu0 %v213
    %243 = vmatprep.subr.bf16.mxu0 0
    %244 = vmatpush1.bf16.msra.mxu0 0
    %245 = vmatprep.subr.bf16.mxu0 0
    %246 = vmatpush1.bf16.msra.mxu0 0
    %247 = vmatprep.subr.bf16.mxu0 0
    %248 = vmatpush1.bf16.msra.mxu0 0
    %249 = vmatprep.subr.bf16.mxu0 0
    %250 = vmatpush1.bf16.msra.mxu0 0
    %251 = vmatprep.subr.bf16.mxu0 0
    %252 = vmatpush1.bf16.msra.mxu0 0
    %253 = vmatprep.subr.bf16.mxu0 0
    %254 = vmatpush1.bf16.msra.mxu0 0
    %255 = vmatprep.subr.bf16.mxu0 0
    %256 = vmatpush1.bf16.msra.mxu0 0
    %257 = vmatprep.subr.bf16.mxu0 0
    %258 = vmatpush1.bf16.msra.mxu0 0
    %259 = vmatprep.subr.bf16.mxu0 0
    %260 = vmatpush1.bf16.msra.mxu0 0
    %261 = vmatprep.subr.bf16.mxu0 0
    %262 = vmatpush1.bf16.msra.mxu0 0
    %263 = vmatprep.mubr.bf16.mxu0 0
    %264 = vmatmul.mubr.bf16.gmra.mrb[0].mxu0 %v229
    %v265 = vpop.f32.mrb[0].mxu0
    %v266 = vadd.f32 %v154, %v265
    %v267 = vpop.f32.mrb[0].mxu0
    %v268 = vadd.f32 %v156, %v267
    %v269 = vpop.f32.mrb[0].mxu0
    %v270 = vadd.f32 %v158, %v269
    %v271 = vpop.f32.mrb[0].mxu0
    %v272 = vadd.f32 %v160, %v271
    %273 = vdwg.mxu0
    %v274 = vld [vmem:[#allocation5] ss:$8 sm:$0x3]
    %v276 = vlaneseq
    %v277 = vshrl.u32 %v276, 7
    %v278 = vsub.s32 0, %v277
    %v279 = vrot.slane %v274, %v278
    %v280 = vlaneseq
    %v281 = vshrl.u32 %v280, 7
    %v282 = vsub.s32 1, %v281
    %v283 = vrot.slane %v274, %v282
    %v286 = vadd.f32 %v266, %v279
    %v287 = vadd.f32 %v268, %v283
    %v288 = vadd.f32 %v270, %v279
    %v289 = vadd.f32 %v272, %v283
    %v290 = vld [vmem:[#allocation5 + $0x9] ss:$0 sm:$0xff]
    %v291 = vld [vmem:[#allocation5 + $0xa] ss:$0 sm:$0xff]
    %292 = vadd.xlane.f32.xlu0 %v287
    %v293 = vpop.xlane.xlu0 %292
    %294 = vadd.xlane.f32.xlu0 %v289
    %v295 = vpop.xlane.xlu0 %294
    %v296 = vrcp.pop 128.0
    %v297 = vmul.f32 %v293, %v296
    %v298 = vmul.f32 %v295, %v296
    %v299 = vsub.f32 %v287, %v297
    %v300 = vsub.f32 %v289, %v298
    %v301 = vmul.f32 %v299, %v299
    %v302 = vmul.f32 %v300, %v300
    %303 = vadd.xlane.f32.xlu0 %v301
    %v304 = vpop.xlane.xlu0 %303
    %305 = vadd.xlane.f32.xlu0 %v302
    %v306 = vpop.xlane.xlu0 %305
    %v307 = vmul.f32 %v304, %v296
    %v308 = vmul.f32 %v306, %v296
    %v309 = vadd.f32 %v307, 1e-05
    %v310 = vadd.f32 %v308, 1e-05
    %v311 = vrsqrt.pop %v309
    %v312 = vrsqrt.pop %v310
    %v313 = vmul.f32 %v299, %v311
    %v314 = vmul.f32 %v300, %v312
    %v315 = vmul.f32 %v313, %v290
    %v316 = vmul.f32 %v314, %v290
    %v317 = vadd.f32 %v315, %v291
    %v318 = vadd.f32 %v316, %v291
    %v319 = vmax.f32 %v317, 0.0
    %v320 = vmax.f32 %v318, 0.0
    %v321 = vld [vmem:[#allocation5 + $0xb] ss:$0 sm:$0xff]
    %v322 = vmul.f32 %v319, %v321
    %v323 = vmul.f32 %v320, %v321
    %324 = vadd.xlane.f32.xlu0 %v322
    %v325 = vpop.xlane.xlu0 %324
    %326 = vadd.xlane.f32.xlu0 %v323
    %v327 = vpop.xlane.xlu0 %326
    %v328 = vld [vmem:[#allocation5 + $0x5] ss:$0 sm:$0xff]
    %v329 = vadd.f32 %v325, %v328
    %v330 = vadd.f32 %v327, %v328
    %vm331 = vcmask 7168
    %332 = vst.msk [vmem:[%s9] sm:$0xff] %vm331, %v329
    %333 = vst.msk [vmem:[%s9 + $0x8] sm:$0xff] %vm331, %v330
    %v334 = vld [vmem:[#allocation5 + $0x1] ss:$0 sm:$0xff]
    %v335 = vld [vmem:[#allocation5 + $0x2] ss:$0 sm:$0xff]
    %336 = vadd.xlane.f32.xlu0 %v286
    %v337 = vpop.xlane.xlu0 %336
    %338 = vadd.xlane.f32.xlu0 %v288
    %v339 = vpop.xlane.xlu0 %338
    %v340 = vmul.f32 %v337, %v296
    %v341 = vmul.f32 %v339, %v296
    %v342 = vsub.f32 %v286, %v340
    %v343 = vsub.f32 %v288, %v341
    %v344 = vmul.f32 %v342, %v342
    %v345 = vmul.f32 %v343, %v343
    %346 = vadd.xlane.f32.xlu0 %v344
    %v347 = vpop.xlane.xlu0 %346
    %348 = vadd.xlane.f32.xlu0 %v345
    %v349 = vpop.xlane.xlu0 %348
    %v350 = vmul.f32 %v347, %v296
    %v351 = vmul.f32 %v349, %v296
    %v352 = vadd.f32 %v350, 1e-05
    %v353 = vadd.f32 %v351, 1e-05
    %v354 = vrsqrt.pop %v352
    %v355 = vrsqrt.pop %v353
    %v356 = vmul.f32 %v342, %v354
    %v357 = vmul.f32 %v343, %v355
    %v358 = vmul.f32 %v356, %v334
    %v359 = vmul.f32 %v357, %v334
    %v360 = vadd.f32 %v358, %v335
    %v361 = vadd.f32 %v359, %v335
    %v362 = vmax.f32 %v360, 0.0
    %v363 = vmax.f32 %v361, 0.0
    %v364 = vpack.c.bf16 %v363, %v362
    %v365 = vld [vmem:[#allocation7] sm:$0xf]
    %v366 = vld [vmem:[#allocation7 + $0x4] sm:$0xf]
    %v367 = vld [vmem:[#allocation7 + $0x8] sm:$0xf]
    %v368 = vld [vmem:[#allocation7 + $0xc] sm:$0xf]
    %v369 = vld [vmem:[#allocation7 + $0x10] sm:$0xf]
    %v370 = vld [vmem:[#allocation7 + $0x14] sm:$0xf]
    %v371 = vld [vmem:[#allocation7 + $0x18] sm:$0xf]
    %v372 = vld [vmem:[#allocation7 + $0x1c] sm:$0xf]
    %v373 = vld [vmem:[#allocation7 + $0x20] sm:$0xf]
    %v374 = vld [vmem:[#allocation7 + $0x24] sm:$0xf]
    %v375 = vld [vmem:[#allocation7 + $0x28] sm:$0xf]
    %v376 = vld [vmem:[#allocation7 + $0x2c] sm:$0xf]
    %v377 = vld [vmem:[#allocation7 + $0x30] sm:$0xf]
    %v378 = vld [vmem:[#allocation7 + $0x34] sm:$0xf]
    %v379 = vld [vmem:[#allocation7 + $0x38] sm:$0xf]
    %v380 = vld [vmem:[#allocation7 + $0x3c] sm:$0xf]
    %v381 = vld [vmem:[#allocation5 + $0x3] ss:$0 sm:$0xff]
    %v398 = vunpack.c.l.b16 %v365
    %v399 = vunpack.c.l.b16 %v366
    %v400 = vunpack.c.l.b16 %v367
    %v401 = vunpack.c.l.b16 %v368
    %v402 = vunpack.c.l.b16 %v369
    %v403 = vunpack.c.l.b16 %v370
    %v404 = vunpack.c.l.b16 %v371
    %v405 = vunpack.c.l.b16 %v372
    %v406 = vunpack.c.l.b16 %v373
    %v407 = vunpack.c.l.b16 %v374
    %v408 = vunpack.c.l.b16 %v375
    %v409 = vunpack.c.l.b16 %v376
    %v410 = vunpack.c.l.b16 %v377
    %v411 = vunpack.c.l.b16 %v378
    %v412 = vunpack.c.l.b16 %v379
    %v413 = vunpack.c.l.b16 %v380
    %v414 = vpack.c.b16 %v399, %v398
    %v415 = vpack.c.b16 %v401, %v400
    %v416 = vpack.c.b16 %v403, %v402
    %v417 = vpack.c.b16 %v405, %v404
    %v418 = vpack.c.b16 %v407, %v406
    %v419 = vpack.c.b16 %v409, %v408
    %v420 = vpack.c.b16 %v411, %v410
    %v421 = vpack.c.b16 %v413, %v412
    %430 = vmatprep.subr.bf16.mxu0 0
    %431 = vmatpush1.bf16.msra.mxu0 %v414
    %432 = vmatprep.subr.bf16.mxu0 0
    %433 = vmatpush1.bf16.msra.mxu0 %v415
    %434 = vmatprep.subr.bf16.mxu0 0
    %435 = vmatpush1.bf16.msra.mxu0 %v416
    %436 = vmatprep.subr.bf16.mxu0 0
    %437 = vmatpush1.bf16.msra.mxu0 %v417
    %438 = vmatprep.subr.bf16.mxu0 0
    %439 = vmatpush1.bf16.msra.mxu0 %v418
    %440 = vmatprep.subr.bf16.mxu0 0
    %441 = vmatpush1.bf16.msra.mxu0 %v419
    %442 = vmatprep.subr.bf16.mxu0 0
    %443 = vmatpush1.bf16.msra.mxu0 %v420
    %444 = vmatprep.subr.bf16.mxu0 0
    %445 = vmatpush1.bf16.msra.mxu0 %v421
    %446 = vmatprep.subr.bf16.mxu0 0
    %447 = vmatpush1.bf16.msra.mxu0 0
    %448 = vmatprep.subr.bf16.mxu0 0
    %449 = vmatpush1.bf16.msra.mxu0 0
    %450 = vmatprep.subr.bf16.mxu0 0
    %451 = vmatpush1.bf16.msra.mxu0 0
    %452 = vmatprep.subr.bf16.mxu0 0
    %453 = vmatpush1.bf16.msra.mxu0 0
    %454 = vmatprep.subr.bf16.mxu0 0
    %455 = vmatpush1.bf16.msra.mxu0 0
    %456 = vmatprep.subr.bf16.mxu0 0
    %457 = vmatpush1.bf16.msra.mxu0 0
    %458 = vmatprep.subr.bf16.mxu0 0
    %459 = vmatpush1.bf16.msra.mxu0 0
    %460 = vmatprep.subr.bf16.mxu0 0
    %461 = vmatpush1.bf16.msra.mxu0 0
    %462 = vmatprep.mubr.bf16.mxu0 0
    %463 = vmatmul.mubr.bf16.gmra.mrb[0].mxu0 %v364
    %v464 = vpop.f32.mrb[0].mxu0
    %v465 = vadd.f32 %v381, %v464
    %v466 = vpop.f32.mrb[0].mxu0
    %v467 = vpop.f32.mrb[0].mxu0
    %v468 = vadd.f32 %v381, %v467
    %v469 = vpop.f32.mrb[0].mxu0
    %470 = vdwg.mxu0
    %v471 = vld [vmem:[#allocation5 + $0x4] ss:$0 sm:$0xff]
    %v472 = vld [vmem:[#allocation5 + $0xc] ss:$0 sm:$0xff]
    %473 = vadd.xlane.f32.xlu0 %v465
    %v474 = vpop.xlane.xlu0 %473
    %475 = vadd.xlane.f32.xlu0 %v468
    %v476 = vpop.xlane.xlu0 %475
    %v477 = vmul.f32 %v474, %v296
    %v478 = vmul.f32 %v476, %v296
    %v479 = vsub.f32 %v465, %v477
    %v480 = vsub.f32 %v468, %v478
    %v481 = vmul.f32 %v479, %v479
    %v482 = vmul.f32 %v480, %v480
    %483 = vadd.xlane.f32.xlu0 %v481
    %v484 = vpop.xlane.xlu0 %483
    %485 = vadd.xlane.f32.xlu0 %v482
    %v486 = vpop.xlane.xlu0 %485
    %v487 = vmul.f32 %v484, %v296
    %v488 = vmul.f32 %v486, %v296
    %v489 = vadd.f32 %v487, 1e-05
    %v490 = vadd.f32 %v488, 1e-05
    %v491 = vrsqrt.pop %v489
    %v492 = vrsqrt.pop %v490
    %v493 = vmul.f32 %v479, %v491
    %v494 = vmul.f32 %v480, %v492
    %v495 = vmul.f32 %v493, %v471
    %v496 = vmul.f32 %v494, %v471
    %v497 = vadd.f32 %v495, %v472
    %v498 = vadd.f32 %v496, %v472
    %v499 = vmax.f32 %v497, 0.0
    %v500 = vmax.f32 %v498, 0.0
    %v501 = vpack.c.bf16 %v500, %v499
    %v502 = vld [vmem:[%s6] sm:$0xff]
    %v503 = vld [vmem:[%s6 + $0x8] sm:$0xf]
    %v504 = vld [vmem:[%s6 + $0xc] sm:$0xff]
    %v505 = vld [vmem:[%s6 + $0x14] sm:$0xf]
    %v506 = vld [vmem:[%s6 + $0x18] sm:$0xff]
    %v507 = vld [vmem:[%s6 + $0x20] sm:$0xf]
    %v508 = vld [vmem:[%s6 + $0x24] sm:$0xff]
    %v509 = vld [vmem:[%s6 + $0x2c] sm:$0xf]
    %v510 = vld [vmem:[%s6 + $0x30] sm:$0xff]
    %v511 = vld [vmem:[%s6 + $0x38] sm:$0xf]
    %v512 = vld [vmem:[%s6 + $0x3c] sm:$0xff]
    %v513 = vld [vmem:[%s6 + $0x44] sm:$0xf]
    %v514 = vld [vmem:[%s6 + $0x48] sm:$0xff]
    %v515 = vld [vmem:[%s6 + $0x50] sm:$0xf]
    %v516 = vld [vmem:[%s6 + $0x54] sm:$0xff]
    %v517 = vld [vmem:[%s6 + $0x5c] sm:$0xf]
    %v518 = vld [vmem:[%s6 + $0x60] sm:$0xff]
    %v519 = vld [vmem:[%s6 + $0x68] sm:$0xf]
    %v520 = vld [vmem:[%s6 + $0x6c] sm:$0xff]
    %v521 = vld [vmem:[%s6 + $0x74] sm:$0xf]
    %v522 = vld [vmem:[%s6 + $0x78] sm:$0xff]
    %v523 = vld [vmem:[%s6 + $0x80] sm:$0xf]
    %v524 = vld [vmem:[%s6 + $0x84] sm:$0xff]
    %v525 = vld [vmem:[%s6 + $0x8c] sm:$0xf]
    %v526 = vld [vmem:[%s6 + $0x90] sm:$0xff]
    %v527 = vld [vmem:[%s6 + $0x98] sm:$0xf]
    %v528 = vld [vmem:[%s6 + $0x9c] sm:$0xff]
    %v529 = vld [vmem:[%s6 + $0xa4] sm:$0xf]
    %v530 = vld [vmem:[%s6 + $0xa8] sm:$0xff]
    %v531 = vld [vmem:[%s6 + $0xb0] sm:$0xf]
    %v532 = vld [vmem:[%s6 + $0xb4] sm:$0xff]
    %v533 = vld [vmem:[%s6 + $0xbc] sm:$0xf]
    %v534 = vld [vmem:[%s7] sm:$0x7]
    %v536 = vlaneseq
    %v537 = vshrl.u32 %v536, 7
    %v538 = vsub.s32 0, %v537
    %v539 = vrot.slane %v534, %v538
    %v540 = vlaneseq
    %v541 = vshrl.u32 %v540, 7
    %v542 = vsub.s32 1, %v541
    %v543 = vrot.slane %v534, %v542
    %v544 = vlaneseq
    %v545 = vshrl.u32 %v544, 7
    %v546 = vsub.s32 2, %v545
    %v547 = vrot.slane %v534, %v546
    %v583 = vunpack.c.l.b16 %v502
    %v584 = vunpack.c.h.b16 %v502
    %v585 = vunpack.c.l.b16 %v503
    %v586 = vunpack.c.l.b16 %v504
    %v587 = vunpack.c.h.b16 %v504
    %v588 = vunpack.c.l.b16 %v505
    %v589 = vunpack.c.l.b16 %v506
    %v590 = vunpack.c.h.b16 %v506
    %v591 = vunpack.c.l.b16 %v507
    %v592 = vunpack.c.l.b16 %v508
    %v593 = vunpack.c.h.b16 %v508
    %v594 = vunpack.c.l.b16 %v509
    %v595 = vunpack.c.l.b16 %v510
    %v596 = vunpack.c.h.b16 %v510
    %v597 = vunpack.c.l.b16 %v511
    %v598 = vunpack.c.l.b16 %v512
    %v599 = vunpack.c.h.b16 %v512
    %v600 = vunpack.c.l.b16 %v513
    %v601 = vunpack.c.l.b16 %v514
    %v602 = vunpack.c.h.b16 %v514
    %v603 = vunpack.c.l.b16 %v515
    %v604 = vunpack.c.l.b16 %v516
    %v605 = vunpack.c.h.b16 %v516
    %v606 = vunpack.c.l.b16 %v517
    %v607 = vunpack.c.l.b16 %v518
    %v608 = vunpack.c.h.b16 %v518
    %v609 = vunpack.c.l.b16 %v519
    %v610 = vunpack.c.l.b16 %v520
    %v611 = vunpack.c.h.b16 %v520
    %v612 = vunpack.c.l.b16 %v521
    %v613 = vunpack.c.l.b16 %v522
    %v614 = vunpack.c.h.b16 %v522
    %v615 = vunpack.c.l.b16 %v523
    %v616 = vunpack.c.l.b16 %v524
    %v617 = vunpack.c.h.b16 %v524
    %v618 = vunpack.c.l.b16 %v525
    %v619 = vunpack.c.l.b16 %v526
    %v620 = vunpack.c.h.b16 %v526
    %v621 = vunpack.c.l.b16 %v527
    %v622 = vunpack.c.l.b16 %v528
    %v623 = vunpack.c.h.b16 %v528
    %v624 = vunpack.c.l.b16 %v529
    %v625 = vunpack.c.l.b16 %v530
    %v626 = vunpack.c.h.b16 %v530
    %v627 = vunpack.c.l.b16 %v531
    %v628 = vunpack.c.l.b16 %v532
    %v629 = vunpack.c.h.b16 %v532
    %v630 = vunpack.c.l.b16 %v533
    %v631 = vpack.c.b16 %v586, %v583
    %v632 = vpack.c.b16 %v587, %v584
    %v633 = vpack.c.b16 %v588, %v585
    %v634 = vpack.c.b16 %v592, %v589
    %v635 = vpack.c.b16 %v593, %v590
    %v636 = vpack.c.b16 %v594, %v591
    %v637 = vpack.c.b16 %v598, %v595
    %v638 = vpack.c.b16 %v599, %v596
    %v639 = vpack.c.b16 %v600, %v597
    %v640 = vpack.c.b16 %v604, %v601
    %v641 = vpack.c.b16 %v605, %v602
    %v642 = vpack.c.b16 %v606, %v603
    %v643 = vpack.c.b16 %v610, %v607
    %v644 = vpack.c.b16 %v611, %v608
    %v645 = vpack.c.b16 %v612, %v609
    %v646 = vpack.c.b16 %v616, %v613
    %v647 = vpack.c.b16 %v617, %v614
    %v648 = vpack.c.b16 %v618, %v615
    %v649 = vpack.c.b16 %v622, %v619
    %v650 = vpack.c.b16 %v623, %v620
    %v651 = vpack.c.b16 %v624, %v621
    %v652 = vpack.c.b16 %v628, %v625
    %v653 = vpack.c.b16 %v629, %v626
    %v654 = vpack.c.b16 %v630, %v627
    %679 = vmatprep.subr.bf16.mxu0 %v632
    %680 = vmatpush1.bf16.msra.mxu0 %v631
    %681 = vmatprep.subr.bf16.mxu0 %v635
    %682 = vmatpush1.bf16.msra.mxu0 %v634
    %683 = vmatprep.subr.bf16.mxu0 %v638
    %684 = vmatpush1.bf16.msra.mxu0 %v637
    %685 = vmatprep.subr.bf16.mxu0 %v641
    %686 = vmatpush1.bf16.msra.mxu0 %v640
    %687 = vmatprep.subr.bf16.mxu0 %v644
    %688 = vmatpush1.bf16.msra.mxu0 %v643
    %689 = vmatprep.subr.bf16.mxu0 %v647
    %690 = vmatpush1.bf16.msra.mxu0 %v646
    %691 = vmatprep.subr.bf16.mxu0 %v650
    %692 = vmatpush1.bf16.msra.mxu0 %v649
    %693 = vmatprep.subr.bf16.mxu0 %v653
    %694 = vmatpush1.bf16.msra.mxu0 %v652
    %695 = vmatprep.subr.bf16.mxu0 0
    %696 = vmatpush1.bf16.msra.mxu0 0
    %697 = vmatprep.subr.bf16.mxu0 0
    %698 = vmatpush1.bf16.msra.mxu0 0
    %699 = vmatprep.subr.bf16.mxu0 0
    %700 = vmatpush1.bf16.msra.mxu0 0
    %701 = vmatprep.subr.bf16.mxu0 0
    %702 = vmatpush1.bf16.msra.mxu0 0
    %703 = vmatprep.subr.bf16.mxu0 0
    %704 = vmatpush1.bf16.msra.mxu0 0
    %705 = vmatprep.subr.bf16.mxu0 0
    %706 = vmatpush1.bf16.msra.mxu0 0
    %707 = vmatprep.subr.bf16.mxu0 0
    %708 = vmatpush1.bf16.msra.mxu0 0
    %709 = vmatprep.subr.bf16.mxu0 0
    %710 = vmatpush1.bf16.msra.mxu0 0
    %711 = vmatprep.mubr.bf16.mxu0 0
    %712 = vmatmul.mubr.bf16.gmra.mrb[0].mxu0 %v501
    %v713 = vpop.f32.mrb[0].mxu0
    %v714 = vadd.f32 %v539, %v713
    %v715 = vpop.f32.mrb[0].mxu0
    %v716 = vadd.f32 %v543, %v715
    %v717 = vpop.f32.mrb[0].mxu0
    %v718 = vadd.f32 %v539, %v717
    %v719 = vpop.f32.mrb[0].mxu0
    %v720 = vadd.f32 %v543, %v719
    %721 = vdwg.mxu0
    %722 = vmatprep.subr.bf16.mxu0 0
    %723 = vmatpush1.bf16.msra.mxu0 %v633
    %724 = vmatprep.subr.bf16.mxu0 0
    %725 = vmatpush1.bf16.msra.mxu0 %v636
    %726 = vmatprep.subr.bf16.mxu0 0
    %727 = vmatpush1.bf16.msra.mxu0 %v639
    %728 = vmatprep.subr.bf16.mxu0 0
    %729 = vmatpush1.bf16.msra.mxu0 %v642
    %730 = vmatprep.subr.bf16.mxu0 0
    %731 = vmatpush1.bf16.msra.mxu0 %v645
    %732 = vmatprep.subr.bf16.mxu0 0
    %733 = vmatpush1.bf16.msra.mxu0 %v648
    %734 = vmatprep.subr.bf16.mxu0 0
    %735 = vmatpush1.bf16.msra.mxu0 %v651
    %736 = vmatprep.subr.bf16.mxu0 0
    %737 = vmatpush1.bf16.msra.mxu0 %v654
    %738 = vmatprep.subr.bf16.mxu0 0
    %739 = vmatpush1.bf16.msra.mxu0 0
    %740 = vmatprep.subr.bf16.mxu0 0
    %741 = vmatpush1.bf16.msra.mxu0 0
    %742 = vmatprep.subr.bf16.mxu0 0
    %743 = vmatpush1.bf16.msra.mxu0 0
    %744 = vmatprep.subr.bf16.mxu0 0
    %745 = vmatpush1.bf16.msra.mxu0 0
    %746 = vmatprep.subr.bf16.mxu0 0
    %747 = vmatpush1.bf16.msra.mxu0 0
    %748 = vmatprep.subr.bf16.mxu0 0
    %749 = vmatpush1.bf16.msra.mxu0 0
    %750 = vmatprep.subr.bf16.mxu0 0
    %751 = vmatpush1.bf16.msra.mxu0 0
    %752 = vmatprep.subr.bf16.mxu0 0
    %753 = vmatpush1.bf16.msra.mxu0 0
    %754 = vmatprep.mubr.bf16.mxu0 0
    %755 = vmatmul.mubr.bf16.gmra.mrb[0].mxu0 %v501
    %v756 = vpop.f32.mrb[0].mxu0
    %v757 = vadd.f32 %v547, %v756
    %v758 = vpop.f32.mrb[0].mxu0
    %v759 = vpop.f32.mrb[0].mxu0
    %v760 = vadd.f32 %v547, %v759
    %v761 = vpop.f32.mrb[0].mxu0
    %762 = vdwg.mxu0
    %763 = vst [vmem:[#allocation8] sm:$0xff] %v714
    %764 = vst [vmem:[#allocation8 + $0x8] sm:$0xff] %v716
    %765 = vst [vmem:[#allocation8 + $0x10] sm:$0xff] %v757
    %766 = vst [vmem:[#allocation8 + $0x18] sm:$0xff] %v718
    %767 = vst [vmem:[#allocation8 + $0x20] sm:$0xff] %v720
    %768 = vst [vmem:[#allocation8 + $0x28] sm:$0xff] %v760
    // Predicated region
    $region46: #{edge_model_forward.3} parent=1 // pred_check
      _
    $region47: #{edge_model_forward.3} parent=1 // pred_check_branch
      %770 = sbr.rel (0) target = $region49
    $region48: #{edge_model_forward.3} parent=1 // pred_region
      %s772 = ssub.s32 768, 768
      %773 = vsyncadd [#allocation4], %s772
      %s774 = sshll.u32 [#allocation8], 4
      %s775 = int_to_ptr.vmem [resolvable:$true] %s774
      %780 = dma.vmem_to_hbm [thread:$0]  %s775, 768, %s8, [#allocation4], 384, 384, 24
    $region49: #{edge_model_forward.3} parent=1 // pred_fallthru
      _
    // Predicated region
    $region50: #{edge_model_forward.3} parent=1 // pred_check
      _
    $region51: #{edge_model_forward.3} parent=1 // pred_check_branch
      %782 = sbr.rel (0) target = $region53
    $region52: #{edge_model_forward.3} parent=1 // pred_region
      _
    $region53: #{edge_model_forward.3} parent=1 // pred_fallthru
      _
    // Predicated region
    $region54: #{edge_model_forward.3} parent=1 // pred_check
      _
    $region55: #{edge_model_forward.3} parent=1 // pred_check_branch
      %784 = sbr.rel (0) target = $region57
    $region56: #{edge_model_forward.3} parent=1 // pred_region
      %785 = dma.done [#allocation4], 768
    $region57: #{edge_model_forward.3} parent=1 // pred_fallthru
      _
    // Predicated region
    $region58: #{edge_model_forward.3} parent=1 // pred_check
      _
    $region59: #{edge_model_forward.3} parent=1 // pred_check_branch
      %787 = sbr.rel (0) target = $region61
    $region60: #{edge_model_forward.3} parent=1 // pred_region
      _
    $region61: #{edge_model_forward.3} parent=1 // pred_fallthru
      _
    %788 = vsyncpa [#allocation3], 1
    %789 = vsyncpa [#allocation6], 1
    %790 = vsyncpa [#allocation4], 1

</llo_original>
